<compile_context>
chip_gen: v7x
topology: tpu7x:2x2x1
jax: 0.10.0
libtpu: 0.0.40
codegen_flags: <defaults>
</compile_context>

<pallas_src>
import functools

import jax
import jax.numpy as jnp
from jax.experimental import pallas as pl
from jax.experimental.pallas import tpu as pltpu  # noqa: F401  (TPU backend / kept for CompilerParams if a grid returns)

# ------------------------------ model dimensions -----------------------------
DIM_EDGE = 8         # edge_feat width
DIM_NODE = 16        # node_feat width
DIM_U = 8            # g_repr width
ACT_DIMS = 5         # add_acts width
ACT_PAD = 8          # add_acts padded to 8 lanes (zero columns / zero weight rows)
HIDDEN = 32          # fc_edge / fc_node / fc_u hidden width
DIM_OUT = 16         # fc_*2 output width

# fc_edge input = [edge_feat | src node_feat | src add_acts | dst node_feat | u]
DIM_EDGE_IN = DIM_EDGE + DIM_NODE + ACT_DIMS + DIM_NODE + DIM_U   # 53
# fc_node input = [node_feat | h | u]
DIM_NODE_IN = DIM_NODE + DIM_OUT + DIM_U                          # 40
# fc_u input    = [n_comb | e_comb | g_repr]
DIM_U_IN = DIM_OUT + DIM_OUT + DIM_U                              # 40

# ----------------------------- graph batch layout -----------------------------
NODES_PER_GRAPH = 4
EDGES_PER_GRAPH = NODES_PER_GRAPH * (NODES_PER_GRAPH - 1)   # 12 (fully connected, no self loops)
NUM_GRAPHS = 8
NUM_NODES = NUM_GRAPHS * NODES_PER_GRAPH                    # 32
NUM_EDGES = NUM_GRAPHS * EDGES_PER_GRAPH                    # 96
TOTAL_ROWS = NUM_EDGES + NUM_NODES + NUM_GRAPHS             # 136 fused output rows (17 * 8)

# --------------------- packed parameter slab layouts (row offsets % 8 == 0) ---------------------
def _layout(pieces):
    off, table = 0, {}
    for name, rows in pieces:
        table[name] = off
        off += rows
    return table, off


W1_PIECES = [                       # slab width = HIDDEN (32)
    ("we_ef",   DIM_EDGE),          # fc_edge rows for edge_feat
    ("we_srcn", DIM_NODE),          # fc_edge rows for src node_feat
    ("we_srca", ACT_PAD),           # fc_edge rows for src add_acts (5 real + 3 zero rows)
    ("we_dstn", DIM_NODE),          # fc_edge rows for dst node_feat
    ("we_u",    DIM_U),             # fc_edge rows for g_repr broadcast
    ("wn_nf",   DIM_NODE),          # fc_node rows for node_feat
    ("wn_h",    DIM_OUT),           # fc_node rows for aggregated edge feats
    ("wn_u",    DIM_U),             # fc_node rows for g_repr broadcast
    ("wu_n",    DIM_OUT),           # fc_u rows for n_comb
    ("wu_e",    DIM_OUT),           # fc_u rows for e_comb
    ("wu_g",    DIM_U),             # fc_u rows for g_repr
    ("b_e", 8), ("b_n", 8), ("b_u", 8),   # first-layer biases (row 0 real, rest zero pad)
]
W1_OFF, W1_ROWS = _layout(W1_PIECES)       # 160 rows x 32

W2_PIECES = [                       # slab width = DIM_OUT (16)
    ("w_e2", HIDDEN), ("w_n2", HIDDEN), ("w_u2", HIDDEN),
    ("b_e2", 8), ("b_n2", 8), ("b_u2", 8),
]
W2_OFF, W2_ROWS = _layout(W2_PIECES)       # 120 rows x 16

assert all(v % 8 == 0 for v in W1_OFF.values()) and W1_ROWS % 8 == 0
assert all(v % 8 == 0 for v in W2_OFF.values()) and W2_ROWS % 8 == 0

STRUCT_ORDER = ["s_src", "s_dst", "g2e", "g2n"]


# -------------------------------- Pallas kernel --------------------------------
def rfm_kernel(ef_ref, nf_ref, acts_ref, g_ref,                 # data
               s_src_ref, s_dst_ref, g2e_ref, g2n_ref,          # graph structure (one-hot)
               w1_ref, w2_ref,                                  # packed parameter slabs
               out_ref):                                        # fused [e_new; n_new; u_new]
    dot = lambda a, b: jnp.dot(a, b, preferred_element_type=jnp.float32)
    # a^T @ b : contract the leading (row) axis of both operands — the MXU consumes the
    # transposed one-hot matrices natively, so no transposed copies are shipped from HBM.
    dot_t = lambda a, b: jax.lax.dot_general(
        a, b, (((0,), (0,)), ((), ())), preferred_element_type=jnp.float32)
    relu = lambda x: jnp.maximum(x, 0.0)

    # static slices of the packed slabs (row offsets are multiples of 8 -> free views)
    def w1s(name, nrows=1):
        off = W1_OFF[name]
        return w1_ref[off:off + nrows, :]

    def w2s(name, nrows=1):
        off = W2_OFF[name]
        return w2_ref[off:off + nrows, :]

    ef = ef_ref[...]        # [E, 8]
    nf = nf_ref[...]        # [N, 16]
    acts = acts_ref[...]    # [N, 8]  (add_acts zero-padded 5 -> 8 lanes)
    g = g_ref[...]          # [G, 8]
    s_src = s_src_ref[...]  # [E, N]
    s_dst = s_dst_ref[...]  # [E, N]
    g2e = g2e_ref[...]      # [E, G]
    g2n = g2n_ref[...]      # [N, G]

    # ---- edge update: fc_edge2(relu(fc_edge([ef | nf[src] | acts[src] | nf[dst] | u]))) ----
    # Associativity rewrite: contract features with the per-group weight splits in
    # node / graph space first, then apply the one-hot gathers, summing f32 partials.
    src_part = dot(nf, w1s("we_srcn", DIM_NODE)) + dot(acts, w1s("we_srca", ACT_PAD))   # [N, H]
    dst_part = dot(nf, w1s("we_dstn", DIM_NODE))                                        # [N, H]
    gu_e = dot(g, w1s("we_u", DIM_U))                                                   # [G, H]
    pre_e = (dot(ef, w1s("we_ef", DIM_EDGE))
             + dot(s_src, src_part)
             + dot(s_dst, dst_part)
             + dot(g2e, gu_e)
             + w1s("b_e"))                                                              # [E, H]
    e_new = dot(relu(pre_e), w2s("w_e2", HIDDEN)) + w2s("b_e2")                         # [E, 16]

    # ---- node update: h = sum of incoming new edge feats; fc_node2(relu(fc_node([nf | h | u]))) ----
    h_agg = dot_t(s_dst, e_new)                                                         # [N, 16]
    gu_n = dot(g, w1s("wn_u", DIM_U))                                                   # [G, H]
    pre_n = (dot(nf, w1s("wn_nf", DIM_NODE))
             + dot(h_agg, w1s("wn_h", DIM_OUT))
             + dot(g2n, gu_n)
             + w1s("b_n"))                                                              # [N, H]
    n_new = dot(relu(pre_n), w2s("w_n2", HIDDEN)) + w2s("b_n2")                         # [N, 16]

    # ---- global update: fc_u2(relu(fc_u([sum_nodes | sum_edges | g_repr]))) ----
    e_comb = dot_t(g2e, e_new)                                                          # [G, 16]
    n_comb = dot_t(g2n, n_new)                                                          # [G, 16]
    pre_u = (dot(n_comb, w1s("wu_n", DIM_OUT))
             + dot(e_comb, w1s("wu_e", DIM_OUT))
             + dot(g, w1s("wu_g", DIM_U))
             + w1s("b_u"))                                                              # [G, H]
    u_new = dot(relu(pre_u), w2s("w_u2", HIDDEN)) + w2s("b_u2")                         # [G, 16]

    # single fused output slab (one writeback DMA); all row offsets multiples of 8
    out_ref[0:NUM_EDGES, :] = e_new
    out_ref[NUM_EDGES:NUM_EDGES + NUM_NODES, :] = n_new
    out_ref[NUM_EDGES + NUM_NODES:TOTAL_ROWS, :] = u_new


# ----------------------- parameter packing (wrapper-side layout plumbing) -----------------------
def pack_params(p):
    """Split the first-layer weights at their logical column groups and pack everything
    into two 8-row-aligned slabs (zero padded)."""
    def rows(x, r):
        return jnp.pad(x, ((0, r - x.shape[0]), (0, 0)))

    w_e, w_n, w_u = p["w_e"], p["w_n"], p["w_u"]
    o0, o1, o2, o3 = DIM_EDGE, DIM_EDGE + DIM_NODE, DIM_EDGE + DIM_NODE + ACT_DIMS, \
        DIM_EDGE + 2 * DIM_NODE + ACT_DIMS
    w1_pieces = {
        "we_ef":   w_e[0:o0],
        "we_srcn": w_e[o0:o1],
        "we_srca": w_e[o1:o2],            # 5 rows, padded to 8 below
        "we_dstn": w_e[o2:o3],
        "we_u":    w_e[o3:],
        "wn_nf":   w_n[0:DIM_NODE],
        "wn_h":    w_n[DIM_NODE:DIM_NODE + DIM_OUT],
        "wn_u":    w_n[DIM_NODE + DIM_OUT:],
        "wu_n":    w_u[0:DIM_OUT],
        "wu_e":    w_u[DIM_OUT:2 * DIM_OUT],
        "wu_g":    w_u[2 * DIM_OUT:],
        "b_e": p["b_e"], "b_n": p["b_n"], "b_u": p["b_u"],
    }
    w1 = jnp.concatenate([rows(w1_pieces[name], r) for name, r in W1_PIECES], axis=0)

    w2_pieces = {"w_e2": p["w_e2"], "w_n2": p["w_n2"], "w_u2": p["w_u2"],
                 "b_e2": p["b_e2"], "b_n2": p["b_n2"], "b_u2": p["b_u2"]}
    w2 = jnp.concatenate([rows(w2_pieces[name], r) for name, r in W2_PIECES], axis=0)
    return w1, w2


# ----------------------------------- wrapper -----------------------------------
@jax.jit
def rfm_block_forward(edge_feat, node_feat, g_repr, add_acts, structs, params):
    """Pallas forward of RFMBlockPseudolikelihood.

    Returns (e_out [E, DIM_OUT], n_out [N, DIM_OUT], u_out [G, DIM_OUT]),
    matching the PyTorch module's (edge feats, node feats, u repr).
    """
    # layout plumbing only: pad add_acts to 8 lanes, pack params into 2 slabs
    acts_p = jnp.pad(add_acts, ((0, 0), (0, ACT_PAD - ACT_DIMS)))
    w1, w2 = pack_params(params)

    # Single whole-batch block, single invocation (grid omitted): the problem is a few
    # hundred KFLOPs, so grid-step launch/DMA-descriptor overhead was the critical path.
    # Total resident footprint is well under 100 KiB — no tiling needed on v5e/v6e/v7x.
    # If the graph batch grows so per-block compute exceeds ~1 us, reintroduce a leading
    # "parallel" grid axis (dimension_semantics=("parallel",)) to shard across v7x's 2 TCs.
    out = pl.pallas_call(
        rfm_kernel,
        out_shape=jax.ShapeDtypeStruct((TOTAL_ROWS, DIM_OUT), jnp.float32),
    )(edge_feat, node_feat, acts_p, g_repr,
      structs["s_src"], structs["s_dst"], structs["g2e"], structs["g2n"],
      w1, w2)

    e_out = out[:NUM_EDGES]
    n_out = out[NUM_EDGES:NUM_EDGES + NUM_NODES]
    u_out = out[NUM_EDGES + NUM_NODES:]
    return e_out, n_out, u_out


# --------------------------- graph / parameter setup ---------------------------
def build_graph():
    """One-hot incidence matrices for the whole batch + index arrays for the reference."""
    srcs, dsts, e_gid, n_gid = [], [], [], []
    for g in range(NUM_GRAPHS):
        base = g * NODES_PER_GRAPH
        for i in range(NODES_PER_GRAPH):
            n_gid.append(g)
            for j in range(NODES_PER_GRAPH):
                if i != j:
                    srcs.append(base + i)
                    dsts.append(base + j)
                    e_gid.append(g)
    s_src = jax.nn.one_hot(jnp.array(srcs, jnp.int32), NUM_NODES, dtype=jnp.float32)   # [E, N]
    s_dst = jax.nn.one_hot(jnp.array(dsts, jnp.int32), NUM_NODES, dtype=jnp.float32)   # [E, N]
    g2e = jax.nn.one_hot(jnp.array(e_gid, jnp.int32), NUM_GRAPHS, dtype=jnp.float32)   # [E, G]
    g2n = jax.nn.one_hot(jnp.array(n_gid, jnp.int32), NUM_GRAPHS, dtype=jnp.float32)   # [N, G]
    structs = dict(s_src=s_src, s_dst=s_dst, g2e=g2e, g2n=g2n)
    gidx = dict(src=jnp.array(srcs, jnp.int32), dst=jnp.array(dsts, jnp.int32),
                e_gid=jnp.array(e_gid, jnp.int32), n_gid=jnp.array(n_gid, jnp.int32))
    return structs, gidx


def init_params(key):
    shapes = {
        "w_e": (DIM_EDGE_IN, HIDDEN), "b_e": (1, HIDDEN),
        "w_e2": (HIDDEN, DIM_OUT), "b_e2": (1, DIM_OUT),
        "w_n": (DIM_NODE_IN, HIDDEN), "b_n": (1, HIDDEN),
        "w_n2": (HIDDEN, DIM_OUT), "b_n2": (1, DIM_OUT),
        "w_u": (DIM_U_IN, HIDDEN), "b_u": (1, HIDDEN),
        "w_u2": (HIDDEN, DIM_OUT), "b_u2": (1, DIM_OUT),
    }
    keys = jax.random.split(key, len(shapes))
    return {name: 0.1 * jax.random.normal(k, shp, dtype=jnp.float32)
            for k, (name, shp) in zip(keys, shapes.items())}


# ------------------------------ pure-JAX reference ------------------------------
def reference(edge_feat, node_feat, g_repr, add_acts, gidx, p):
    """Highest-precision reference of the DGL forward (gather / segment_sum form)."""
    mm = functools.partial(jnp.dot, precision=jax.lax.Precision.HIGHEST)
    relu = lambda x: jnp.maximum(x, 0.0)
    src, dst = gidx["src"], gidx["dst"]
    e_gid, n_gid = gidx["e_gid"], gidx["n_gid"]

    inp_e = jnp.concatenate([edge_feat, node_feat[src], add_acts[src],
                             node_feat[dst], g_repr[e_gid]], axis=-1)
    e_new = mm(relu(mm(inp_e, p["w_e"]) + p["b_e"]), p["w_e2"]) + p["b_e2"]

    h = jax.ops.segment_sum(e_new, dst, num_segments=node_feat.shape[0])
    inp_n = jnp.concatenate([node_feat, h, g_repr[n_gid]], axis=-1)
    n_new = mm(relu(mm(inp_n, p["w_n"]) + p["b_n"]), p["w_n2"]) + p["b_n2"]

    e_comb = jax.ops.segment_sum(e_new, e_gid, num_segments=g_repr.shape[0])
    n_comb = jax.ops.segment_sum(n_new, n_gid, num_segments=g_repr.shape[0])
    inp_u = jnp.concatenate([n_comb, e_comb, g_repr], axis=-1)
    u_out = mm(relu(mm(inp_u, p["w_u"]) + p["b_u"]), p["w_u2"]) + p["b_u2"]
    return e_new, n_new, u_out


# ------------------------------------- main -------------------------------------
if __name__ == "__main__":
    key = jax.random.PRNGKey(0)
    k_p, k_e, k_n, k_g, k_a = jax.random.split(key, 5)

    params = init_params(k_p)
    structs, gidx = build_graph()

    edge_feat = jax.random.normal(k_e, (NUM_EDGES, DIM_EDGE), dtype=jnp.float32)
    node_feat = jax.random.normal(k_n, (NUM_NODES, DIM_NODE), dtype=jnp.float32)
    g_repr = jax.random.normal(k_g, (NUM_GRAPHS, DIM_U), dtype=jnp.float32)
    add_acts = jax.random.normal(k_a, (NUM_NODES, ACT_DIMS), dtype=jnp.float32)

    e_out, n_out, u_out = rfm_block_forward(edge_feat, node_feat, g_repr, add_acts,
                                            structs, params)
    jax.block_until_ready((e_out, n_out, u_out))

    # correctness check against an independent (gather / segment_sum) reference
    ref_e, ref_n, ref_u = reference(edge_feat, node_feat, g_repr, add_acts, gidx, params)
    assert jnp.allclose(e_out, ref_e, rtol=1e-4, atol=1e-4), float(jnp.max(jnp.abs(e_out - ref_e)))
    assert jnp.allclose(n_out, ref_n, rtol=1e-4, atol=1e-4), float(jnp.max(jnp.abs(n_out - ref_n)))
    assert jnp.allclose(u_out, ref_u, rtol=1e-4, atol=1e-4), float(jnp.max(jnp.abs(u_out - ref_u)))

    print("KERNEL_OK")
</pallas_src>

<mosaic_0001>
module attributes {stable_mosaic.version = 11 : i64} {
  func.func @rfm_kernel(%arg0: memref<96x8xf32, #tpu.memory_space<vmem>>, %arg1: memref<32x16xf32, #tpu.memory_space<vmem>>, %arg2: memref<32x8xf32, #tpu.memory_space<vmem>>, %arg3: memref<8x8xf32, #tpu.memory_space<vmem>>, %arg4: memref<96x32xf32, #tpu.memory_space<vmem>>, %arg5: memref<96x32xf32, #tpu.memory_space<vmem>>, %arg6: memref<96x8xf32, #tpu.memory_space<vmem>>, %arg7: memref<32x8xf32, #tpu.memory_space<vmem>>, %arg8: memref<160x32xf32, #tpu.memory_space<vmem>>, %arg9: memref<120x16xf32, #tpu.memory_space<vmem>>, %arg10: memref<136x16xf32, #tpu.memory_space<vmem>>) attributes {dimension_semantics = [], scalar_prefetch = 0 : i64, scratch_operands = 0 : i64, tpu.core_type = #tpu.core_type<tc>} {
    %c0 = arith.constant 0 : index
    %c0_0 = arith.constant 0 : index
    %0 = vector.load %arg0[%c0, %c0_0] : memref<96x8xf32, #tpu.memory_space<vmem>>, vector<96x8xf32>
    %c0_1 = arith.constant 0 : index
    %c0_2 = arith.constant 0 : index
    %1 = vector.load %arg1[%c0_1, %c0_2] : memref<32x16xf32, #tpu.memory_space<vmem>>, vector<32x16xf32>
    %c0_3 = arith.constant 0 : index
    %c0_4 = arith.constant 0 : index
    %2 = vector.load %arg2[%c0_3, %c0_4] : memref<32x8xf32, #tpu.memory_space<vmem>>, vector<32x8xf32>
    %c0_5 = arith.constant 0 : index
    %c0_6 = arith.constant 0 : index
    %3 = vector.load %arg3[%c0_5, %c0_6] : memref<8x8xf32, #tpu.memory_space<vmem>>, vector<8x8xf32>
    %c0_7 = arith.constant 0 : index
    %c0_8 = arith.constant 0 : index
    %4 = vector.load %arg4[%c0_7, %c0_8] : memref<96x32xf32, #tpu.memory_space<vmem>>, vector<96x32xf32>
    %c0_9 = arith.constant 0 : index
    %c0_10 = arith.constant 0 : index
    %5 = vector.load %arg5[%c0_9, %c0_10] : memref<96x32xf32, #tpu.memory_space<vmem>>, vector<96x32xf32>
    %c0_11 = arith.constant 0 : index
    %c0_12 = arith.constant 0 : index
    %6 = vector.load %arg6[%c0_11, %c0_12] : memref<96x8xf32, #tpu.memory_space<vmem>>, vector<96x8xf32>
    %c0_13 = arith.constant 0 : index
    %c0_14 = arith.constant 0 : index
    %7 = vector.load %arg7[%c0_13, %c0_14] : memref<32x8xf32, #tpu.memory_space<vmem>>, vector<32x8xf32>
    %c8 = arith.constant 8 : index
    %c0_15 = arith.constant 0 : index
    %8 = vector.load %arg8[%c8, %c0_15] : memref<160x32xf32, #tpu.memory_space<vmem>>, vector<16x32xf32>
    %cst = arith.constant dense<0.000000e+00> : vector<32x32xf32>
    %9 = tpu.matmul %1, %8, %cst {dimension_numbers = #tpu.dot_dimension_numbers<[1], [0], [0], [1], [0, 0, 1, 1], [], []>} : vector<32x16xf32>, vector<16x32xf32>, vector<32x32xf32> -> vector<32x32xf32>
    %c24 = arith.constant 24 : index
    %c0_16 = arith.constant 0 : index
    %10 = vector.load %arg8[%c24, %c0_16] : memref<160x32xf32, #tpu.memory_space<vmem>>, vector<8x32xf32>
    %cst_17 = arith.constant dense<0.000000e+00> : vector<32x32xf32>
    %11 = tpu.matmul %2, %10, %cst_17 {dimension_numbers = #tpu.dot_dimension_numbers<[1], [0], [0], [1], [0, 0, 1, 1], [], []>} : vector<32x8xf32>, vector<8x32xf32>, vector<32x32xf32> -> vector<32x32xf32>
    %12 = arith.addf %9, %11 : vector<32x32xf32>
    %c32 = arith.constant 32 : index
    %c0_18 = arith.constant 0 : index
    %13 = vector.load %arg8[%c32, %c0_18] : memref<160x32xf32, #tpu.memory_space<vmem>>, vector<16x32xf32>
    %cst_19 = arith.constant dense<0.000000e+00> : vector<32x32xf32>
    %14 = tpu.matmul %1, %13, %cst_19 {dimension_numbers = #tpu.dot_dimension_numbers<[1], [0], [0], [1], [0, 0, 1, 1], [], []>} : vector<32x16xf32>, vector<16x32xf32>, vector<32x32xf32> -> vector<32x32xf32>
    %c48 = arith.constant 48 : index
    %c0_20 = arith.constant 0 : index
    %15 = vector.load %arg8[%c48, %c0_20] : memref<160x32xf32, #tpu.memory_space<vmem>>, vector<8x32xf32>
    %cst_21 = arith.constant dense<0.000000e+00> : vector<8x32xf32>
    %16 = tpu.matmul %3, %15, %cst_21 {dimension_numbers = #tpu.dot_dimension_numbers<[1], [0], [0], [1], [0, 0, 1, 1], [], []>} : vector<8x8xf32>, vector<8x32xf32>, vector<8x32xf32> -> vector<8x32xf32>
    %c0_22 = arith.constant 0 : index
    %c0_23 = arith.constant 0 : index
    %17 = vector.load %arg8[%c0_22, %c0_23] : memref<160x32xf32, #tpu.memory_space<vmem>>, vector<8x32xf32>
    %cst_24 = arith.constant dense<0.000000e+00> : vector<96x32xf32>
    %18 = tpu.matmul %0, %17, %cst_24 {dimension_numbers = #tpu.dot_dimension_numbers<[1], [0], [0], [1], [0, 0, 1, 1], [], []>} : vector<96x8xf32>, vector<8x32xf32>, vector<96x32xf32> -> vector<96x32xf32>
    %cst_25 = arith.constant dense<0.000000e+00> : vector<96x32xf32>
    %19 = tpu.matmul %4, %12, %cst_25 {dimension_numbers = #tpu.dot_dimension_numbers<[1], [0], [0], [1], [0, 0, 1, 1], [], []>} : vector<96x32xf32>, vector<32x32xf32>, vector<96x32xf32> -> vector<96x32xf32>
    %20 = arith.addf %18, %19 : vector<96x32xf32>
    %cst_26 = arith.constant dense<0.000000e+00> : vector<96x32xf32>
    %21 = tpu.matmul %5, %14, %cst_26 {dimension_numbers = #tpu.dot_dimension_numbers<[1], [0], [0], [1], [0, 0, 1, 1], [], []>} : vector<96x32xf32>, vector<32x32xf32>, vector<96x32xf32> -> vector<96x32xf32>
    %22 = arith.addf %20, %21 : vector<96x32xf32>
    %cst_27 = arith.constant dense<0.000000e+00> : vector<96x32xf32>
    %23 = tpu.matmul %6, %16, %cst_27 {dimension_numbers = #tpu.dot_dimension_numbers<[1], [0], [0], [1], [0, 0, 1, 1], [], []>} : vector<96x8xf32>, vector<8x32xf32>, vector<96x32xf32> -> vector<96x32xf32>
    %24 = arith.addf %22, %23 : vector<96x32xf32>
    %c136 = arith.constant 136 : index
    %c0_28 = arith.constant 0 : index
    %25 = vector.load %arg8[%c136, %c0_28] : memref<160x32xf32, #tpu.memory_space<vmem>>, vector<1x32xf32>
    %26 = vector.broadcast %25 : vector<1x32xf32> to vector<96x32xf32>
    %27 = arith.addf %24, %26 : vector<96x32xf32>
    %cst_29 = arith.constant 0.000000e+00 : f32
    %28 = vector.broadcast %cst_29 : f32 to vector<96x32xf32>
    %29 = arith.maximumf %27, %28 : vector<96x32xf32>
    %c0_30 = arith.constant 0 : index
    %c0_31 = arith.constant 0 : index
    %30 = vector.load %arg9[%c0_30, %c0_31] : memref<120x16xf32, #tpu.memory_space<vmem>>, vector<32x16xf32>
    %cst_32 = arith.constant dense<0.000000e+00> : vector<96x16xf32>
    %31 = tpu.matmul %29, %30, %cst_32 {dimension_numbers = #tpu.dot_dimension_numbers<[1], [0], [0], [1], [0, 0, 1, 1], [], []>} : vector<96x32xf32>, vector<32x16xf32>, vector<96x16xf32> -> vector<96x16xf32>
    %c96 = arith.constant 96 : index
    %c0_33 = arith.constant 0 : index
    %32 = vector.load %arg9[%c96, %c0_33] : memref<120x16xf32, #tpu.memory_space<vmem>>, vector<1x16xf32>
    %33 = vector.broadcast %32 : vector<1x16xf32> to vector<96x16xf32>
    %34 = arith.addf %31, %33 : vector<96x16xf32>
    %cst_34 = arith.constant dense<0.000000e+00> : vector<32x16xf32>
    %35 = tpu.matmul %5, %34, %cst_34 {dimension_numbers = #tpu.dot_dimension_numbers<[0], [0], [1], [1], [0, 1, 1, 1], [], []>} : vector<96x32xf32>, vector<96x16xf32>, vector<32x16xf32> -> vector<32x16xf32>
    %c88 = arith.constant 88 : index
    %c0_35 = arith.constant 0 : index
    %36 = vector.load %arg8[%c88, %c0_35] : memref<160x32xf32, #tpu.memory_space<vmem>>, vector<8x32xf32>
    %cst_36 = arith.constant dense<0.000000e+00> : vector<8x32xf32>
    %37 = tpu.matmul %3, %36, %cst_36 {dimension_numbers = #tpu.dot_dimension_numbers<[1], [0], [0], [1], [0, 0, 1, 1], [], []>} : vector<8x8xf32>, vector<8x32xf32>, vector<8x32xf32> -> vector<8x32xf32>
    %c56 = arith.constant 56 : index
    %c0_37 = arith.constant 0 : index
    %38 = vector.load %arg8[%c56, %c0_37] : memref<160x32xf32, #tpu.memory_space<vmem>>, vector<16x32xf32>
    %cst_38 = arith.constant dense<0.000000e+00> : vector<32x32xf32>
    %39 = tpu.matmul %1, %38, %cst_38 {dimension_numbers = #tpu.dot_dimension_numbers<[1], [0], [0], [1], [0, 0, 1, 1], [], []>} : vector<32x16xf32>, vector<16x32xf32>, vector<32x32xf32> -> vector<32x32xf32>
    %c72 = arith.constant 72 : index
    %c0_39 = arith.constant 0 : index
    %40 = vector.load %arg8[%c72, %c0_39] : memref<160x32xf32, #tpu.memory_space<vmem>>, vector<16x32xf32>
    %cst_40 = arith.constant dense<0.000000e+00> : vector<32x32xf32>
    %41 = tpu.matmul %35, %40, %cst_40 {dimension_numbers = #tpu.dot_dimension_numbers<[1], [0], [0], [1], [0, 0, 1, 1], [], []>} : vector<32x16xf32>, vector<16x32xf32>, vector<32x32xf32> -> vector<32x32xf32>
    %42 = arith.addf %39, %41 : vector<32x32xf32>
    %cst_41 = arith.constant dense<0.000000e+00> : vector<32x32xf32>
    %43 = tpu.matmul %7, %37, %cst_41 {dimension_numbers = #tpu.dot_dimension_numbers<[1], [0], [0], [1], [0, 0, 1, 1], [], []>} : vector<32x8xf32>, vector<8x32xf32>, vector<32x32xf32> -> vector<32x32xf32>
    %44 = arith.addf %42, %43 : vector<32x32xf32>
    %c144 = arith.constant 144 : index
    %c0_42 = arith.constant 0 : index
    %45 = vector.load %arg8[%c144, %c0_42] : memref<160x32xf32, #tpu.memory_space<vmem>>, vector<1x32xf32>
    %46 = vector.broadcast %45 : vector<1x32xf32> to vector<32x32xf32>
    %47 = arith.addf %44, %46 : vector<32x32xf32>
    %cst_43 = arith.constant 0.000000e+00 : f32
    %48 = vector.broadcast %cst_43 : f32 to vector<32x32xf32>
    %49 = arith.maximumf %47, %48 : vector<32x32xf32>
    %c32_44 = arith.constant 32 : index
    %c0_45 = arith.constant 0 : index
    %50 = vector.load %arg9[%c32_44, %c0_45] : memref<120x16xf32, #tpu.memory_space<vmem>>, vector<32x16xf32>
    %cst_46 = arith.constant dense<0.000000e+00> : vector<32x16xf32>
    %51 = tpu.matmul %49, %50, %cst_46 {dimension_numbers = #tpu.dot_dimension_numbers<[1], [0], [0], [1], [0, 0, 1, 1], [], []>} : vector<32x32xf32>, vector<32x16xf32>, vector<32x16xf32> -> vector<32x16xf32>
    %c104 = arith.constant 104 : index
    %c0_47 = arith.constant 0 : index
    %52 = vector.load %arg9[%c104, %c0_47] : memref<120x16xf32, #tpu.memory_space<vmem>>, vector<1x16xf32>
    %53 = vector.broadcast %52 : vector<1x16xf32> to vector<32x16xf32>
    %54 = arith.addf %51, %53 : vector<32x16xf32>
    %cst_48 = arith.constant dense<0.000000e+00> : vector<8x16xf32>
    %55 = tpu.matmul %6, %34, %cst_48 {dimension_numbers = #tpu.dot_dimension_numbers<[0], [0], [1], [1], [0, 1, 1, 1], [], []>} : vector<96x8xf32>, vector<96x16xf32>, vector<8x16xf32> -> vector<8x16xf32>
    %cst_49 = arith.constant dense<0.000000e+00> : vector<8x16xf32>
    %56 = tpu.matmul %7, %54, %cst_49 {dimension_numbers = #tpu.dot_dimension_numbers<[0], [0], [1], [1], [0, 1, 1, 1], [], []>} : vector<32x8xf32>, vector<32x16xf32>, vector<8x16xf32> -> vector<8x16xf32>
    %c96_50 = arith.constant 96 : index
    %c0_51 = arith.constant 0 : index
    %57 = vector.load %arg8[%c96_50, %c0_51] : memref<160x32xf32, #tpu.memory_space<vmem>>, vector<16x32xf32>
    %cst_52 = arith.constant dense<0.000000e+00> : vector<8x32xf32>
    %58 = tpu.matmul %56, %57, %cst_52 {dimension_numbers = #tpu.dot_dimension_numbers<[1], [0], [0], [1], [0, 0, 1, 1], [], []>} : vector<8x16xf32>, vector<16x32xf32>, vector<8x32xf32> -> vector<8x32xf32>
    %c112 = arith.constant 112 : index
    %c0_53 = arith.constant 0 : index
    %59 = vector.load %arg8[%c112, %c0_53] : memref<160x32xf32, #tpu.memory_space<vmem>>, vector<16x32xf32>
    %cst_54 = arith.constant dense<0.000000e+00> : vector<8x32xf32>
    %60 = tpu.matmul %55, %59, %cst_54 {dimension_numbers = #tpu.dot_dimension_numbers<[1], [0], [0], [1], [0, 0, 1, 1], [], []>} : vector<8x16xf32>, vector<16x32xf32>, vector<8x32xf32> -> vector<8x32xf32>
    %61 = arith.addf %58, %60 : vector<8x32xf32>
    %c128 = arith.constant 128 : index
    %c0_55 = arith.constant 0 : index
    %62 = vector.load %arg8[%c128, %c0_55] : memref<160x32xf32, #tpu.memory_space<vmem>>, vector<8x32xf32>
    %cst_56 = arith.constant dense<0.000000e+00> : vector<8x32xf32>
    %63 = tpu.matmul %3, %62, %cst_56 {dimension_numbers = #tpu.dot_dimension_numbers<[1], [0], [0], [1], [0, 0, 1, 1], [], []>} : vector<8x8xf32>, vector<8x32xf32>, vector<8x32xf32> -> vector<8x32xf32>
    %64 = arith.addf %61, %63 : vector<8x32xf32>
    %c152 = arith.constant 152 : index
    %c0_57 = arith.constant 0 : index
    %65 = vector.load %arg8[%c152, %c0_57] : memref<160x32xf32, #tpu.memory_space<vmem>>, vector<1x32xf32>
    %66 = vector.broadcast %65 : vector<1x32xf32> to vector<8x32xf32>
    %67 = arith.addf %64, %66 : vector<8x32xf32>
    %cst_58 = arith.constant 0.000000e+00 : f32
    %68 = vector.broadcast %cst_58 : f32 to vector<8x32xf32>
    %69 = arith.maximumf %67, %68 : vector<8x32xf32>
    %c64 = arith.constant 64 : index
    %c0_59 = arith.constant 0 : index
    %70 = vector.load %arg9[%c64, %c0_59] : memref<120x16xf32, #tpu.memory_space<vmem>>, vector<32x16xf32>
    %cst_60 = arith.constant dense<0.000000e+00> : vector<8x16xf32>
    %71 = tpu.matmul %69, %70, %cst_60 {dimension_numbers = #tpu.dot_dimension_numbers<[1], [0], [0], [1], [0, 0, 1, 1], [], []>} : vector<8x32xf32>, vector<32x16xf32>, vector<8x16xf32> -> vector<8x16xf32>
    %c112_61 = arith.constant 112 : index
    %c0_62 = arith.constant 0 : index
    %72 = vector.load %arg9[%c112_61, %c0_62] : memref<120x16xf32, #tpu.memory_space<vmem>>, vector<1x16xf32>
    %73 = vector.broadcast %72 : vector<1x16xf32> to vector<8x16xf32>
    %74 = arith.addf %71, %73 : vector<8x16xf32>
    %c0_63 = arith.constant 0 : index
    %c0_64 = arith.constant 0 : index
    %75 = vector.load %arg10[%c0_63, %c0_64] : memref<136x16xf32, #tpu.memory_space<vmem>>, vector<96x16xf32>
    tpu.vector_store %arg10[%c0_63, %c0_64], %34 {strides = array<i32>} : memref<136x16xf32, #tpu.memory_space<vmem>>, vector<96x16xf32>,
    %c96_65 = arith.constant 96 : index
    %c0_66 = arith.constant 0 : index
    %76 = vector.load %arg10[%c96_65, %c0_66] : memref<136x16xf32, #tpu.memory_space<vmem>>, vector<32x16xf32>
    tpu.vector_store %arg10[%c96_65, %c0_66], %54 {strides = array<i32>} : memref<136x16xf32, #tpu.memory_space<vmem>>, vector<32x16xf32>,
    %c128_67 = arith.constant 128 : index
    %c0_68 = arith.constant 0 : index
    %77 = vector.load %arg10[%c128_67, %c0_68] : memref<136x16xf32, #tpu.memory_space<vmem>>, vector<8x16xf32>
    tpu.vector_store %arg10[%c128_67, %c0_68], %74 {strides = array<i32>} : memref<136x16xf32, #tpu.memory_space<vmem>>, vector<8x16xf32>,
    return
  }
}

</mosaic_0001>

<llo_original>
// kernel: rfm_block_forward.1
$region0: #{rfm_block_forward.1}
  #allocation0 [shape = 'u32[]', space=smem, size = 0x4, offset = 0x4, fixed_abs, tag = 'smem constant byte address 0x4 - core index']
  #allocation1 [shape = 'u32[144,128]{1,0:T(1,128)}', space=vmem, size = 0x12000, scoped, tag = 'internal scratch']
  %s0 = inlined_call_operand.vmem [shape: f32[96,8], index: 0, kind: input, shape index: {}]
  %s1 = inlined_call_operand.vmem [shape: f32[32,16], index: 1, kind: input, shape index: {}]
  %s2 = inlined_call_operand.vmem [shape: f32[32,8], index: 2, kind: input, shape index: {}]
  %s3 = inlined_call_operand.vmem [shape: f32[8,8], index: 3, kind: input, shape index: {}]
  %s4 = inlined_call_operand.vmem [shape: f32[96,32], index: 4, kind: input, shape index: {}]
  %s5 = inlined_call_operand.vmem [shape: f32[96,32], index: 5, kind: input, shape index: {}]
  %s6 = inlined_call_operand.vmem [shape: f32[96,8], index: 6, kind: input, shape index: {}]
  %s7 = inlined_call_operand.vmem [shape: f32[32,8], index: 7, kind: input, shape index: {}]
  %s8 = inlined_call_operand.vmem [shape: f32[160,32], index: 8, kind: input, shape index: {}]
  %s9 = inlined_call_operand.vmem [shape: f32[120,16], index: 9, kind: input, shape index: {}]
  %s10 = inlined_call_operand.vmem [shape: f32[136,16], index: 10, kind: output, shape index: {}]
  %s11 = sld [smem:[#allocation0]]
  $region50: #{rfm_block_forward.1} parent=0
    _
  %s13 = ssub.s32 1, %s11
  %s14 = scalar_select 0, %s13, %s11
  // Predicated region
  $region2: #{rfm_block_forward.1} parent=0 // pred_check
    _
  $region3: #{rfm_block_forward.1} parent=0 // pred_check_branch
    %16 = sbr.rel (0) target = $region5
  $region4: #{rfm_block_forward.1} parent=0 // pred_region
    _
  $region5: #{rfm_block_forward.1} parent=0 // pred_fallthru
    _
  // Predicated region
  $region6: #{rfm_block_forward.1} parent=0 // pred_check
    _
  $region7: #{rfm_block_forward.1} parent=0 // pred_check_branch
    %18 = sbr.rel (0) target = $region9
  $region8: #{rfm_block_forward.1} parent=0 // pred_region
    _
  $region9: #{rfm_block_forward.1} parent=0 // pred_fallthru
    _
  // Predicated region
  $region10: #{rfm_block_forward.1} parent=0 // pred_check
    _
  $region11: #{rfm_block_forward.1} parent=0 // pred_check_branch
    %20 = sbr.rel (0) target = $region13
  $region12: #{rfm_block_forward.1} parent=0 // pred_region
    _
  $region13: #{rfm_block_forward.1} parent=0 // pred_fallthru
    _
  // Predicated region
  $region14: #{rfm_block_forward.1} parent=0 // pred_check
    _
  $region15: #{rfm_block_forward.1} parent=0 // pred_check_branch
    %22 = sbr.rel (0) target = $region17
  $region16: #{rfm_block_forward.1} parent=0 // pred_region
    _
  $region17: #{rfm_block_forward.1} parent=0 // pred_fallthru
    _
  // Predicated region
  $region18: #{rfm_block_forward.1} parent=0 // pred_check
    _
  $region19: #{rfm_block_forward.1} parent=0 // pred_check_branch
    %24 = sbr.rel (0) target = $region21
  $region20: #{rfm_block_forward.1} parent=0 // pred_region
    _
  $region21: #{rfm_block_forward.1} parent=0 // pred_fallthru
    _
  // Predicated region
  $region22: #{rfm_block_forward.1} parent=0 // pred_check
    _
  $region23: #{rfm_block_forward.1} parent=0 // pred_check_branch
    %26 = sbr.rel (0) target = $region25
  $region24: #{rfm_block_forward.1} parent=0 // pred_region
    _
  $region25: #{rfm_block_forward.1} parent=0 // pred_fallthru
    _
  // Predicated region
  $region26: #{rfm_block_forward.1} parent=0 // pred_check
    _
  $region27: #{rfm_block_forward.1} parent=0 // pred_check_branch
    %28 = sbr.rel (0) target = $region29
  $region28: #{rfm_block_forward.1} parent=0 // pred_region
    _
  $region29: #{rfm_block_forward.1} parent=0 // pred_fallthru
    _
  // Predicated region
  $region30: #{rfm_block_forward.1} parent=0 // pred_check
    _
  $region31: #{rfm_block_forward.1} parent=0 // pred_check_branch
    %30 = sbr.rel (0) target = $region33
  $region32: #{rfm_block_forward.1} parent=0 // pred_region
    _
  $region33: #{rfm_block_forward.1} parent=0 // pred_fallthru
    _
  // Predicated region
  $region34: #{rfm_block_forward.1} parent=0 // pred_check
    _
  $region35: #{rfm_block_forward.1} parent=0 // pred_check_branch
    %32 = sbr.rel (0) target = $region37
  $region36: #{rfm_block_forward.1} parent=0 // pred_region
    _
  $region37: #{rfm_block_forward.1} parent=0 // pred_fallthru
    _
  // Predicated region
  $region38: #{rfm_block_forward.1} parent=0 // pred_check
    _
  $region39: #{rfm_block_forward.1} parent=0 // pred_check_branch
    %34 = sbr.rel (0) target = $region41
  $region40: #{rfm_block_forward.1} parent=0 // pred_region
    _
  $region41: #{rfm_block_forward.1} parent=0 // pred_fallthru
    _
  %v35 = vld [vmem:[%s0] sm:$0xff]
  %v36 = vld [vmem:[%s0 + $0x8] sm:$0xff]
  %v37 = vld [vmem:[%s0 + $0x10] sm:$0xff]
  %v38 = vld [vmem:[%s0 + $0x18] sm:$0xff]
  %v39 = vld [vmem:[%s0 + $0x20] sm:$0xff]
  %v40 = vld [vmem:[%s0 + $0x28] sm:$0xff]
  %v41 = vld [vmem:[%s0 + $0x30] sm:$0xff]
  %v42 = vld [vmem:[%s0 + $0x38] sm:$0xff]
  %v43 = vld [vmem:[%s0 + $0x40] sm:$0xff]
  %v44 = vld [vmem:[%s0 + $0x48] sm:$0xff]
  %v45 = vld [vmem:[%s0 + $0x50] sm:$0xff]
  %v46 = vld [vmem:[%s0 + $0x58] sm:$0xff]
  %v47 = vld [vmem:[%s1] sm:$0xff]
  %v48 = vld [vmem:[%s1 + $0x8] sm:$0xff]
  %v49 = vld [vmem:[%s1 + $0x10] sm:$0xff]
  %v50 = vld [vmem:[%s1 + $0x18] sm:$0xff]
  %v51 = vld [vmem:[%s2] sm:$0xff]
  %v52 = vld [vmem:[%s2 + $0x8] sm:$0xff]
  %v53 = vld [vmem:[%s2 + $0x10] sm:$0xff]
  %v54 = vld [vmem:[%s2 + $0x18] sm:$0xff]
  %v55 = vld [vmem:[%s3] sm:$0xff]
  %v56 = vld [vmem:[%s4] sm:$0xff]
  %v57 = vld [vmem:[%s4 + $0x8] sm:$0xff]
  %v58 = vld [vmem:[%s4 + $0x10] sm:$0xff]
  %v59 = vld [vmem:[%s4 + $0x18] sm:$0xff]
  %v60 = vld [vmem:[%s4 + $0x20] sm:$0xff]
  %v61 = vld [vmem:[%s4 + $0x28] sm:$0xff]
  %v62 = vld [vmem:[%s4 + $0x30] sm:$0xff]
  %v63 = vld [vmem:[%s4 + $0x38] sm:$0xff]
  %v64 = vld [vmem:[%s4 + $0x40] sm:$0xff]
  %v65 = vld [vmem:[%s4 + $0x48] sm:$0xff]
  %v66 = vld [vmem:[%s4 + $0x50] sm:$0xff]
  %v67 = vld [vmem:[%s4 + $0x58] sm:$0xff]
  %v68 = vld [vmem:[%s5] sm:$0xff]
  %v69 = vld [vmem:[%s5 + $0x8] sm:$0xff]
  %v70 = vld [vmem:[%s5 + $0x10] sm:$0xff]
  %v71 = vld [vmem:[%s5 + $0x18] sm:$0xff]
  %v72 = vld [vmem:[%s5 + $0x20] sm:$0xff]
  %v73 = vld [vmem:[%s5 + $0x28] sm:$0xff]
  %v74 = vld [vmem:[%s5 + $0x30] sm:$0xff]
  %v75 = vld [vmem:[%s5 + $0x38] sm:$0xff]
  %v76 = vld [vmem:[%s5 + $0x40] sm:$0xff]
  %v77 = vld [vmem:[%s5 + $0x48] sm:$0xff]
  %v78 = vld [vmem:[%s5 + $0x50] sm:$0xff]
  %v79 = vld [vmem:[%s5 + $0x58] sm:$0xff]
  %v80 = vld [vmem:[%s6] sm:$0xff]
  %v81 = vld [vmem:[%s6 + $0x8] sm:$0xff]
  %v82 = vld [vmem:[%s6 + $0x10] sm:$0xff]
  %v83 = vld [vmem:[%s6 + $0x18] sm:$0xff]
  %v84 = vld [vmem:[%s6 + $0x20] sm:$0xff]
  %v85 = vld [vmem:[%s6 + $0x28] sm:$0xff]
  %v86 = vld [vmem:[%s6 + $0x30] sm:$0xff]
  %v87 = vld [vmem:[%s6 + $0x38] sm:$0xff]
  %v88 = vld [vmem:[%s6 + $0x40] sm:$0xff]
  %v89 = vld [vmem:[%s6 + $0x48] sm:$0xff]
  %v90 = vld [vmem:[%s6 + $0x50] sm:$0xff]
  %v91 = vld [vmem:[%s6 + $0x58] sm:$0xff]
  %v92 = vld [vmem:[%s7] sm:$0xff]
  %v93 = vld [vmem:[%s7 + $0x8] sm:$0xff]
  %v94 = vld [vmem:[%s7 + $0x10] sm:$0xff]
  %v95 = vld [vmem:[%s7 + $0x18] sm:$0xff]
  %v96 = vld [vmem:[%s8 + $0x8] sm:$0xff]
  %v97 = vld [vmem:[%s8 + $0x10] sm:$0xff]
  %v98 = vld [vmem:[%s8 + $0x18] sm:$0xff]
  %vm99 = vcmask 64512
  %v101 = vsel %vm99, %v51, 0
  %v104 = vsel %vm99, %v52, 0
  %v107 = vsel %vm99, %v53, 0
  %v110 = vsel %vm99, %v54, 0
  %112 = vmatprep.subr.mxu0 0.0
  %113 = vmatpush1.msra.mxu0 %v98
  %114 = vmatprep.subr.mxu0 0.0
  %115 = vmatpush1.msra.mxu0 0.0
  %116 = vmatprep.subr.mxu0 0.0
  %117 = vmatpush1.msra.mxu0 0.0
  %118 = vmatprep.subr.mxu0 0.0
  %119 = vmatpush1.msra.mxu0 0.0
  %120 = vmatprep.subr.mxu0 0.0
  %121 = vmatpush1.msra.mxu0 0.0
  %122 = vmatprep.subr.mxu0 0.0
  %123 = vmatpush1.msra.mxu0 0.0
  %124 = vmatprep.subr.mxu0 0.0
  %125 = vmatpush1.msra.mxu0 0.0
  %126 = vmatprep.subr.mxu0 0.0
  %127 = vmatpush1.msra.mxu0 0.0
  %128 = vmatprep.subr.mxu0 0.0
  %129 = vmatpush1.msra.mxu0 0.0
  %130 = vmatprep.subr.mxu0 0.0
  %131 = vmatpush1.msra.mxu0 0.0
  %132 = vmatprep.subr.mxu0 0.0
  %133 = vmatpush1.msra.mxu0 0.0
  %134 = vmatprep.subr.mxu0 0.0
  %135 = vmatpush1.msra.mxu0 0.0
  %136 = vmatprep.subr.mxu0 0.0
  %137 = vmatpush1.msra.mxu0 0.0
  %138 = vmatprep.subr.mxu0 0.0
  %139 = vmatpush1.msra.mxu0 0.0
  %140 = vmatprep.subr.mxu0 0.0
  %141 = vmatpush1.msra.mxu0 0.0
  %142 = vmatprep.subr.mxu0 0.0
  %143 = vmatpush1.msra.mxu0 0.0
  %144 = vmatprep.subr.mxu0 0.0
  %145 = vmatpush1.msra.mxu0 0.0
  %146 = vmatprep.subr.mxu0 0.0
  %147 = vmatpush1.msra.mxu0 0.0
  %148 = vmatprep.subr.mxu0 0.0
  %149 = vmatpush1.msra.mxu0 0.0
  %150 = vmatprep.subr.mxu0 0.0
  %151 = vmatpush1.msra.mxu0 0.0
  %152 = vmatprep.subr.mxu0 0.0
  %153 = vmatpush1.msra.mxu0 0.0
  %154 = vmatprep.subr.mxu0 0.0
  %155 = vmatpush1.msra.mxu0 0.0
  %156 = vmatprep.subr.mxu0 0.0
  %157 = vmatpush1.msra.mxu0 0.0
  %158 = vmatprep.subr.mxu0 0.0
  %159 = vmatpush1.msra.mxu0 0.0
  %160 = vmatprep.subr.mxu0 0.0
  %161 = vmatpush1.msra.mxu0 0.0
  %162 = vmatprep.subr.mxu0 0.0
  %163 = vmatpush1.msra.mxu0 0.0
  %164 = vmatprep.subr.mxu0 0.0
  %165 = vmatpush1.msra.mxu0 0.0
  %166 = vmatprep.subr.mxu0 0.0
  %167 = vmatpush1.msra.mxu0 0.0
  %168 = vmatprep.subr.mxu0 0.0
  %169 = vmatpush1.msra.mxu0 0.0
  %170 = vmatprep.subr.mxu0 0.0
  %171 = vmatpush1.msra.mxu0 0.0
  %172 = vmatprep.subr.mxu0 0.0
  %173 = vmatpush1.msra.mxu0 0.0
  %174 = vmatprep.subr.mxu0 0.0
  %175 = vmatpush1.msra.mxu0 0.0
  %176 = vmatprep.mubr.f32.mxu0 0.0
  %177 = vmatmul.mubr.f32.gmra.mrb[0].mxu0 %v101
  %v178 = vpop.f32.mrb[0].mxu0
  %v179 = vadd.f32 0.0, %v178
  %v180 = vpop.f32.mrb[0].mxu0
  %181 = vmatprep.mubr.f32.mxu0 0.0
  %182 = vmatmul.mubr.f32.gmra.mrb[0].mxu0 %v104
  %v183 = vpop.f32.mrb[0].mxu0
  %v184 = vadd.f32 0.0, %v183
  %v185 = vpop.f32.mrb[0].mxu0
  %186 = vmatprep.mubr.f32.mxu0 0.0
  %187 = vmatmul.mubr.f32.gmra.mrb[0].mxu0 %v107
  %v188 = vpop.f32.mrb[0].mxu0
  %v189 = vadd.f32 0.0, %v188
  %v190 = vpop.f32.mrb[0].mxu0
  %191 = vmatprep.mubr.f32.mxu0 0.0
  %192 = vmatmul.mubr.f32.gmra.mrb[0].mxu0 %v110
  %v193 = vpop.f32.mrb[0].mxu0
  %v194 = vadd.f32 0.0, %v193
  %v195 = vpop.f32.mrb[0].mxu0
  %196 = vdwg.mxu0
  %vm197 = vcmask 130048
  %v199 = vsel %vm197, %v47, 0
  %v202 = vsel %vm197, %v48, 0
  %v205 = vsel %vm197, %v49, 0
  %v208 = vsel %vm197, %v50, 0
  %210 = vmatprep.subr.mxu0 0.0
  %211 = vmatpush1.msra.mxu0 %v96
  %212 = vmatprep.subr.mxu0 0.0
  %213 = vmatpush1.msra.mxu0 %v97
  %214 = vmatprep.subr.mxu0 0.0
  %215 = vmatpush1.msra.mxu0 0.0
  %216 = vmatprep.subr.mxu0 0.0
  %217 = vmatpush1.msra.mxu0 0.0
  %218 = vmatprep.subr.mxu0 0.0
  %219 = vmatpush1.msra.mxu0 0.0
  %220 = vmatprep.subr.mxu0 0.0
  %221 = vmatpush1.msra.mxu0 0.0
  %222 = vmatprep.subr.mxu0 0.0
  %223 = vmatpush1.msra.mxu0 0.0
  %224 = vmatprep.subr.mxu0 0.0
  %225 = vmatpush1.msra.mxu0 0.0
  %226 = vmatprep.subr.mxu0 0.0
  %227 = vmatpush1.msra.mxu0 0.0
  %228 = vmatprep.subr.mxu0 0.0
  %229 = vmatpush1.msra.mxu0 0.0
  %230 = vmatprep.subr.mxu0 0.0
  %231 = vmatpush1.msra.mxu0 0.0
  %232 = vmatprep.subr.mxu0 0.0
  %233 = vmatpush1.msra.mxu0 0.0
  %234 = vmatprep.subr.mxu0 0.0
  %235 = vmatpush1.msra.mxu0 0.0
  %236 = vmatprep.subr.mxu0 0.0
  %237 = vmatpush1.msra.mxu0 0.0
  %238 = vmatprep.subr.mxu0 0.0
  %239 = vmatpush1.msra.mxu0 0.0
  %240 = vmatprep.subr.mxu0 0.0
  %241 = vmatpush1.msra.mxu0 0.0
  %242 = vmatprep.subr.mxu0 0.0
  %243 = vmatpush1.msra.mxu0 0.0
  %244 = vmatprep.subr.mxu0 0.0
  %245 = vmatpush1.msra.mxu0 0.0
  %246 = vmatprep.subr.mxu0 0.0
  %247 = vmatpush1.msra.mxu0 0.0
  %248 = vmatprep.subr.mxu0 0.0
  %249 = vmatpush1.msra.mxu0 0.0
  %250 = vmatprep.subr.mxu0 0.0
  %251 = vmatpush1.msra.mxu0 0.0
  %252 = vmatprep.subr.mxu0 0.0
  %253 = vmatpush1.msra.mxu0 0.0
  %254 = vmatprep.subr.mxu0 0.0
  %255 = vmatpush1.msra.mxu0 0.0
  %256 = vmatprep.subr.mxu0 0.0
  %257 = vmatpush1.msra.mxu0 0.0
  %258 = vmatprep.subr.mxu0 0.0
  %259 = vmatpush1.msra.mxu0 0.0
  %260 = vmatprep.subr.mxu0 0.0
  %261 = vmatpush1.msra.mxu0 0.0
  %262 = vmatprep.subr.mxu0 0.0
  %263 = vmatpush1.msra.mxu0 0.0
  %264 = vmatprep.subr.mxu0 0.0
  %265 = vmatpush1.msra.mxu0 0.0
  %266 = vmatprep.subr.mxu0 0.0
  %267 = vmatpush1.msra.mxu0 0.0
  %268 = vmatprep.subr.mxu0 0.0
  %269 = vmatpush1.msra.mxu0 0.0
  %270 = vmatprep.subr.mxu0 0.0
  %271 = vmatpush1.msra.mxu0 0.0
  %272 = vmatprep.subr.mxu0 0.0
  %273 = vmatpush1.msra.mxu0 0.0
  %274 = vmatprep.mubr.f32.mxu0 0.0
  %275 = vmatmul.mubr.f32.gmra.mrb[0].mxu0 %v199
  %v276 = vpop.f32.mrb[0].mxu0
  %v277 = vadd.f32 %v179, %v276
  %v278 = vpop.f32.mrb[0].mxu0
  %279 = vmatprep.mubr.f32.mxu0 0.0
  %280 = vmatmul.mubr.f32.gmra.mrb[0].mxu0 %v202
  %v281 = vpop.f32.mrb[0].mxu0
  %v282 = vadd.f32 %v184, %v281
  %v283 = vpop.f32.mrb[0].mxu0
  %284 = vmatprep.mubr.f32.mxu0 0.0
  %285 = vmatmul.mubr.f32.gmra.mrb[0].mxu0 %v205
  %v286 = vpop.f32.mrb[0].mxu0
  %v287 = vadd.f32 %v189, %v286
  %v288 = vpop.f32.mrb[0].mxu0
  %289 = vmatprep.mubr.f32.mxu0 0.0
  %290 = vmatmul.mubr.f32.gmra.mrb[0].mxu0 %v208
  %v291 = vpop.f32.mrb[0].mxu0
  %v292 = vadd.f32 %v194, %v291
  %v293 = vpop.f32.mrb[0].mxu0
  %294 = vdwg.mxu0
  %v295 = vld [vmem:[%s8 + $0x20] sm:$0xff]
  %v296 = vld [vmem:[%s8 + $0x28] sm:$0xff]
  %297 = vmatprep.subr.mxu0 0.0
  %298 = vmatpush1.msra.mxu0 %v295
  %299 = vmatprep.subr.mxu0 0.0
  %300 = vmatpush1.msra.mxu0 %v296
  %301 = vmatprep.subr.mxu0 0.0
  %302 = vmatpush1.msra.mxu0 0.0
  %303 = vmatprep.subr.mxu0 0.0
  %304 = vmatpush1.msra.mxu0 0.0
  %305 = vmatprep.subr.mxu0 0.0
  %306 = vmatpush1.msra.mxu0 0.0
  %307 = vmatprep.subr.mxu0 0.0
  %308 = vmatpush1.msra.mxu0 0.0
  %309 = vmatprep.subr.mxu0 0.0
  %310 = vmatpush1.msra.mxu0 0.0
  %311 = vmatprep.subr.mxu0 0.0
  %312 = vmatpush1.msra.mxu0 0.0
  %313 = vmatprep.subr.mxu0 0.0
  %314 = vmatpush1.msra.mxu0 0.0
  %315 = vmatprep.subr.mxu0 0.0
  %316 = vmatpush1.msra.mxu0 0.0
  %317 = vmatprep.subr.mxu0 0.0
  %318 = vmatpush1.msra.mxu0 0.0
  %319 = vmatprep.subr.mxu0 0.0
  %320 = vmatpush1.msra.mxu0 0.0
  %321 = vmatprep.subr.mxu0 0.0
  %322 = vmatpush1.msra.mxu0 0.0
  %323 = vmatprep.subr.mxu0 0.0
  %324 = vmatpush1.msra.mxu0 0.0
  %325 = vmatprep.subr.mxu0 0.0
  %326 = vmatpush1.msra.mxu0 0.0
  %327 = vmatprep.subr.mxu0 0.0
  %328 = vmatpush1.msra.mxu0 0.0
  %329 = vmatprep.subr.mxu0 0.0
  %330 = vmatpush1.msra.mxu0 0.0
  %331 = vmatprep.subr.mxu0 0.0
  %332 = vmatpush1.msra.mxu0 0.0
  %333 = vmatprep.subr.mxu0 0.0
  %334 = vmatpush1.msra.mxu0 0.0
  %335 = vmatprep.subr.mxu0 0.0
  %336 = vmatpush1.msra.mxu0 0.0
  %337 = vmatprep.subr.mxu0 0.0
  %338 = vmatpush1.msra.mxu0 0.0
  %339 = vmatprep.subr.mxu0 0.0
  %340 = vmatpush1.msra.mxu0 0.0
  %341 = vmatprep.subr.mxu0 0.0
  %342 = vmatpush1.msra.mxu0 0.0
  %343 = vmatprep.subr.mxu0 0.0
  %344 = vmatpush1.msra.mxu0 0.0
  %345 = vmatprep.subr.mxu0 0.0
  %346 = vmatpush1.msra.mxu0 0.0
  %347 = vmatprep.subr.mxu0 0.0
  %348 = vmatpush1.msra.mxu0 0.0
  %349 = vmatprep.subr.mxu0 0.0
  %350 = vmatpush1.msra.mxu0 0.0
  %351 = vmatprep.subr.mxu0 0.0
  %352 = vmatpush1.msra.mxu0 0.0
  %353 = vmatprep.subr.mxu0 0.0
  %354 = vmatpush1.msra.mxu0 0.0
  %355 = vmatprep.subr.mxu0 0.0
  %356 = vmatpush1.msra.mxu0 0.0
  %357 = vmatprep.subr.mxu0 0.0
  %358 = vmatpush1.msra.mxu0 0.0
  %359 = vmatprep.subr.mxu0 0.0
  %360 = vmatpush1.msra.mxu0 0.0
  %361 = vmatprep.mubr.f32.mxu0 0.0
  %362 = vmatmul.mubr.f32.gmra.mrb[0].mxu0 %v199
  %v363 = vpop.f32.mrb[0].mxu0
  %v364 = vadd.f32 0.0, %v363
  %v365 = vpop.f32.mrb[0].mxu0
  %366 = vmatprep.mubr.f32.mxu0 0.0
  %367 = vmatmul.mubr.f32.gmra.mrb[0].mxu0 %v202
  %v368 = vpop.f32.mrb[0].mxu0
  %v369 = vadd.f32 0.0, %v368
  %v370 = vpop.f32.mrb[0].mxu0
  %371 = vmatprep.mubr.f32.mxu0 0.0
  %372 = vmatmul.mubr.f32.gmra.mrb[0].mxu0 %v205
  %v373 = vpop.f32.mrb[0].mxu0
  %v374 = vadd.f32 0.0, %v373
  %v375 = vpop.f32.mrb[0].mxu0
  %376 = vmatprep.mubr.f32.mxu0 0.0
  %377 = vmatmul.mubr.f32.gmra.mrb[0].mxu0 %v208
  %v378 = vpop.f32.mrb[0].mxu0
  %v379 = vadd.f32 0.0, %v378
  %v380 = vpop.f32.mrb[0].mxu0
  %381 = vdwg.mxu0
  %v382 = vld [vmem:[%s8 + $0x30] sm:$0xff]
  %v384 = vsel %vm99, %v55, 0
  %386 = vmatprep.subr.mxu0 0.0
  %387 = vmatpush1.msra.mxu0 %v382
  %388 = vmatprep.subr.mxu0 0.0
  %389 = vmatpush1.msra.mxu0 0.0
  %390 = vmatprep.subr.mxu0 0.0
  %391 = vmatpush1.msra.mxu0 0.0
  %392 = vmatprep.subr.mxu0 0.0
  %393 = vmatpush1.msra.mxu0 0.0
  %394 = vmatprep.subr.mxu0 0.0
  %395 = vmatpush1.msra.mxu0 0.0
  %396 = vmatprep.subr.mxu0 0.0
  %397 = vmatpush1.msra.mxu0 0.0
  %398 = vmatprep.subr.mxu0 0.0
  %399 = vmatpush1.msra.mxu0 0.0
  %400 = vmatprep.subr.mxu0 0.0
  %401 = vmatpush1.msra.mxu0 0.0
  %402 = vmatprep.subr.mxu0 0.0
  %403 = vmatpush1.msra.mxu0 0.0
  %404 = vmatprep.subr.mxu0 0.0
  %405 = vmatpush1.msra.mxu0 0.0
  %406 = vmatprep.subr.mxu0 0.0
  %407 = vmatpush1.msra.mxu0 0.0
  %408 = vmatprep.subr.mxu0 0.0
  %409 = vmatpush1.msra.mxu0 0.0
  %410 = vmatprep.subr.mxu0 0.0
  %411 = vmatpush1.msra.mxu0 0.0
  %412 = vmatprep.subr.mxu0 0.0
  %413 = vmatpush1.msra.mxu0 0.0
  %414 = vmatprep.subr.mxu0 0.0
  %415 = vmatpush1.msra.mxu0 0.0
  %416 = vmatprep.subr.mxu0 0.0
  %417 = vmatpush1.msra.mxu0 0.0
  %418 = vmatprep.subr.mxu0 0.0
  %419 = vmatpush1.msra.mxu0 0.0
  %420 = vmatprep.subr.mxu0 0.0
  %421 = vmatpush1.msra.mxu0 0.0
  %422 = vmatprep.subr.mxu0 0.0
  %423 = vmatpush1.msra.mxu0 0.0
  %424 = vmatprep.subr.mxu0 0.0
  %425 = vmatpush1.msra.mxu0 0.0
  %426 = vmatprep.subr.mxu0 0.0
  %427 = vmatpush1.msra.mxu0 0.0
  %428 = vmatprep.subr.mxu0 0.0
  %429 = vmatpush1.msra.mxu0 0.0
  %430 = vmatprep.subr.mxu0 0.0
  %431 = vmatpush1.msra.mxu0 0.0
  %432 = vmatprep.subr.mxu0 0.0
  %433 = vmatpush1.msra.mxu0 0.0
  %434 = vmatprep.subr.mxu0 0.0
  %435 = vmatpush1.msra.mxu0 0.0
  %436 = vmatprep.subr.mxu0 0.0
  %437 = vmatpush1.msra.mxu0 0.0
  %438 = vmatprep.subr.mxu0 0.0
  %439 = vmatpush1.msra.mxu0 0.0
  %440 = vmatprep.subr.mxu0 0.0
  %441 = vmatpush1.msra.mxu0 0.0
  %442 = vmatprep.subr.mxu0 0.0
  %443 = vmatpush1.msra.mxu0 0.0
  %444 = vmatprep.subr.mxu0 0.0
  %445 = vmatpush1.msra.mxu0 0.0
  %446 = vmatprep.subr.mxu0 0.0
  %447 = vmatpush1.msra.mxu0 0.0
  %448 = vmatprep.subr.mxu0 0.0
  %449 = vmatpush1.msra.mxu0 0.0
  %450 = vmatprep.mubr.f32.mxu0 0.0
  %451 = vmatmul.mubr.f32.gmra.mrb[0].mxu0 %v384
  %v452 = vpop.f32.mrb[0].mxu0
  %v453 = vadd.f32 0.0, %v452
  %v454 = vpop.f32.mrb[0].mxu0
  %455 = vdwg.mxu0
  %v456 = vld [vmem:[%s8] sm:$0xff]
  %vm457 = vcmask 261120
  %v459 = vsel %vm457, %v56, 0
  %v462 = vsel %vm457, %v57, 0
  %v465 = vsel %vm457, %v58, 0
  %v468 = vsel %vm457, %v59, 0
  %v471 = vsel %vm457, %v60, 0
  %v474 = vsel %vm457, %v61, 0
  %v477 = vsel %vm457, %v62, 0
  %v480 = vsel %vm457, %v63, 0
  %v483 = vsel %vm457, %v64, 0
  %v486 = vsel %vm457, %v65, 0
  %v489 = vsel %vm457, %v66, 0
  %v492 = vsel %vm457, %v67, 0
  %494 = vmatprep.subr.mxu0 0.0
  %495 = vmatpush1.msra.mxu0 %v277
  %496 = vmatprep.subr.mxu0 0.0
  %497 = vmatpush1.msra.mxu0 %v282
  %498 = vmatprep.subr.mxu0 0.0
  %499 = vmatpush1.msra.mxu0 %v287
  %500 = vmatprep.subr.mxu0 0.0
  %501 = vmatpush1.msra.mxu0 %v292
  %502 = vmatprep.subr.mxu0 0.0
  %503 = vmatpush1.msra.mxu0 0.0
  %504 = vmatprep.subr.mxu0 0.0
  %505 = vmatpush1.msra.mxu0 0.0
  %506 = vmatprep.subr.mxu0 0.0
  %507 = vmatpush1.msra.mxu0 0.0
  %508 = vmatprep.subr.mxu0 0.0
  %509 = vmatpush1.msra.mxu0 0.0
  %510 = vmatprep.subr.mxu0 0.0
  %511 = vmatpush1.msra.mxu0 0.0
  %512 = vmatprep.subr.mxu0 0.0
  %513 = vmatpush1.msra.mxu0 0.0
  %514 = vmatprep.subr.mxu0 0.0
  %515 = vmatpush1.msra.mxu0 0.0
  %516 = vmatprep.subr.mxu0 0.0
  %517 = vmatpush1.msra.mxu0 0.0
  %518 = vmatprep.subr.mxu0 0.0
  %519 = vmatpush1.msra.mxu0 0.0
  %520 = vmatprep.subr.mxu0 0.0
  %521 = vmatpush1.msra.mxu0 0.0
  %522 = vmatprep.subr.mxu0 0.0
  %523 = vmatpush1.msra.mxu0 0.0
  %524 = vmatprep.subr.mxu0 0.0
  %525 = vmatpush1.msra.mxu0 0.0
  %526 = vmatprep.subr.mxu0 0.0
  %527 = vmatpush1.msra.mxu0 0.0
  %528 = vmatprep.subr.mxu0 0.0
  %529 = vmatpush1.msra.mxu0 0.0
  %530 = vmatprep.subr.mxu0 0.0
  %531 = vmatpush1.msra.mxu0 0.0
  %532 = vmatprep.subr.mxu0 0.0
  %533 = vmatpush1.msra.mxu0 0.0
  %534 = vmatprep.subr.mxu0 0.0
  %535 = vmatpush1.msra.mxu0 0.0
  %536 = vmatprep.subr.mxu0 0.0
  %537 = vmatpush1.msra.mxu0 0.0
  %538 = vmatprep.subr.mxu0 0.0
  %539 = vmatpush1.msra.mxu0 0.0
  %540 = vmatprep.subr.mxu0 0.0
  %541 = vmatpush1.msra.mxu0 0.0
  %542 = vmatprep.subr.mxu0 0.0
  %543 = vmatpush1.msra.mxu0 0.0
  %544 = vmatprep.subr.mxu0 0.0
  %545 = vmatpush1.msra.mxu0 0.0
  %546 = vmatprep.subr.mxu0 0.0
  %547 = vmatpush1.msra.mxu0 0.0
  %548 = vmatprep.subr.mxu0 0.0
  %549 = vmatpush1.msra.mxu0 0.0
  %550 = vmatprep.subr.mxu0 0.0
  %551 = vmatpush1.msra.mxu0 0.0
  %552 = vmatprep.subr.mxu0 0.0
  %553 = vmatpush1.msra.mxu0 0.0
  %554 = vmatprep.subr.mxu0 0.0
  %555 = vmatpush1.msra.mxu0 0.0
  %556 = vmatprep.subr.mxu0 0.0
  %557 = vmatpush1.msra.mxu0 0.0
  %558 = vmatprep.mubr.f32.mxu0 0.0
  %559 = vmatmul.mubr.f32.gmra.mrb[0].mxu0 %v459
  %v560 = vpop.f32.mrb[0].mxu0
  %v561 = vadd.f32 0.0, %v560
  %v562 = vpop.f32.mrb[0].mxu0
  %563 = vmatprep.mubr.f32.mxu0 0.0
  %564 = vmatmul.mubr.f32.gmra.mrb[0].mxu0 %v462
  %v565 = vpop.f32.mrb[0].mxu0
  %v566 = vadd.f32 0.0, %v565
  %v567 = vpop.f32.mrb[0].mxu0
  %568 = vmatprep.mubr.f32.mxu0 0.0
  %569 = vmatmul.mubr.f32.gmra.mrb[0].mxu0 %v465
  %v570 = vpop.f32.mrb[0].mxu0
  %v571 = vadd.f32 0.0, %v570
  %v572 = vpop.f32.mrb[0].mxu0
  %573 = vmatprep.mubr.f32.mxu0 0.0
  %574 = vmatmul.mubr.f32.gmra.mrb[0].mxu0 %v468
  %v575 = vpop.f32.mrb[0].mxu0
  %v576 = vadd.f32 0.0, %v575
  %v577 = vpop.f32.mrb[0].mxu0
  %578 = vmatprep.mubr.f32.mxu0 0.0
  %579 = vmatmul.mubr.f32.gmra.mrb[0].mxu0 %v471
  %v580 = vpop.f32.mrb[0].mxu0
  %v581 = vadd.f32 0.0, %v580
  %v582 = vpop.f32.mrb[0].mxu0
  %583 = vmatprep.mubr.f32.mxu0 0.0
  %584 = vmatmul.mubr.f32.gmra.mrb[0].mxu0 %v474
  %v585 = vpop.f32.mrb[0].mxu0
  %v586 = vadd.f32 0.0, %v585
  %v587 = vpop.f32.mrb[0].mxu0
  %588 = vmatprep.mubr.f32.mxu0 0.0
  %589 = vmatmul.mubr.f32.gmra.mrb[0].mxu0 %v477
  %v590 = vpop.f32.mrb[0].mxu0
  %v591 = vadd.f32 0.0, %v590
  %v592 = vpop.f32.mrb[0].mxu0
  %593 = vmatprep.mubr.f32.mxu0 0.0
  %594 = vmatmul.mubr.f32.gmra.mrb[0].mxu0 %v480
  %v595 = vpop.f32.mrb[0].mxu0
  %v596 = vadd.f32 0.0, %v595
  %v597 = vpop.f32.mrb[0].mxu0
  %598 = vmatprep.mubr.f32.mxu0 0.0
  %599 = vmatmul.mubr.f32.gmra.mrb[0].mxu0 %v483
  %v600 = vpop.f32.mrb[0].mxu0
  %v601 = vadd.f32 0.0, %v600
  %v602 = vpop.f32.mrb[0].mxu0
  %603 = vmatprep.mubr.f32.mxu0 0.0
  %604 = vmatmul.mubr.f32.gmra.mrb[0].mxu0 %v486
  %v605 = vpop.f32.mrb[0].mxu0
  %v606 = vadd.f32 0.0, %v605
  %v607 = vpop.f32.mrb[0].mxu0
  %608 = vmatprep.mubr.f32.mxu0 0.0
  %609 = vmatmul.mubr.f32.gmra.mrb[0].mxu0 %v489
  %v610 = vpop.f32.mrb[0].mxu0
  %v611 = vadd.f32 0.0, %v610
  %v612 = vpop.f32.mrb[0].mxu0
  %613 = vmatprep.mubr.f32.mxu0 0.0
  %614 = vmatmul.mubr.f32.gmra.mrb[0].mxu0 %v492
  %v615 = vpop.f32.mrb[0].mxu0
  %v616 = vadd.f32 0.0, %v615
  %v617 = vpop.f32.mrb[0].mxu0
  %618 = vdwg.mxu0
  %v620 = vsel %vm99, %v35, 0
  %v623 = vsel %vm99, %v36, 0
  %v626 = vsel %vm99, %v37, 0
  %v629 = vsel %vm99, %v38, 0
  %v632 = vsel %vm99, %v39, 0
  %v635 = vsel %vm99, %v40, 0
  %v638 = vsel %vm99, %v41, 0
  %v641 = vsel %vm99, %v42, 0
  %v644 = vsel %vm99, %v43, 0
  %v647 = vsel %vm99, %v44, 0
  %v650 = vsel %vm99, %v45, 0
  %v653 = vsel %vm99, %v46, 0
  %655 = vmatprep.subr.mxu0 0.0
  %656 = vmatpush1.msra.mxu0 %v456
  %657 = vmatprep.subr.mxu0 0.0
  %658 = vmatpush1.msra.mxu0 0.0
  %659 = vmatprep.subr.mxu0 0.0
  %660 = vmatpush1.msra.mxu0 0.0
  %661 = vmatprep.subr.mxu0 0.0
  %662 = vmatpush1.msra.mxu0 0.0
  %663 = vmatprep.subr.mxu0 0.0
  %664 = vmatpush1.msra.mxu0 0.0
  %665 = vmatprep.subr.mxu0 0.0
  %666 = vmatpush1.msra.mxu0 0.0
  %667 = vmatprep.subr.mxu0 0.0
  %668 = vmatpush1.msra.mxu0 0.0
  %669 = vmatprep.subr.mxu0 0.0
  %670 = vmatpush1.msra.mxu0 0.0
  %671 = vmatprep.subr.mxu0 0.0
  %672 = vmatpush1.msra.mxu0 0.0
  %673 = vmatprep.subr.mxu0 0.0
  %674 = vmatpush1.msra.mxu0 0.0
  %675 = vmatprep.subr.mxu0 0.0
  %676 = vmatpush1.msra.mxu0 0.0
  %677 = vmatprep.subr.mxu0 0.0
  %678 = vmatpush1.msra.mxu0 0.0
  %679 = vmatprep.subr.mxu0 0.0
  %680 = vmatpush1.msra.mxu0 0.0
  %681 = vmatprep.subr.mxu0 0.0
  %682 = vmatpush1.msra.mxu0 0.0
  %683 = vmatprep.subr.mxu0 0.0
  %684 = vmatpush1.msra.mxu0 0.0
  %685 = vmatprep.subr.mxu0 0.0
  %686 = vmatpush1.msra.mxu0 0.0
  %687 = vmatprep.subr.mxu0 0.0
  %688 = vmatpush1.msra.mxu0 0.0
  %689 = vmatprep.subr.mxu0 0.0
  %690 = vmatpush1.msra.mxu0 0.0
  %691 = vmatprep.subr.mxu0 0.0
  %692 = vmatpush1.msra.mxu0 0.0
  %693 = vmatprep.subr.mxu0 0.0
  %694 = vmatpush1.msra.mxu0 0.0
  %695 = vmatprep.subr.mxu0 0.0
  %696 = vmatpush1.msra.mxu0 0.0
  %697 = vmatprep.subr.mxu0 0.0
  %698 = vmatpush1.msra.mxu0 0.0
  %699 = vmatprep.subr.mxu0 0.0
  %700 = vmatpush1.msra.mxu0 0.0
  %701 = vmatprep.subr.mxu0 0.0
  %702 = vmatpush1.msra.mxu0 0.0
  %703 = vmatprep.subr.mxu0 0.0
  %704 = vmatpush1.msra.mxu0 0.0
  %705 = vmatprep.subr.mxu0 0.0
  %706 = vmatpush1.msra.mxu0 0.0
  %707 = vmatprep.subr.mxu0 0.0
  %708 = vmatpush1.msra.mxu0 0.0
  %709 = vmatprep.subr.mxu0 0.0
  %710 = vmatpush1.msra.mxu0 0.0
  %711 = vmatprep.subr.mxu0 0.0
  %712 = vmatpush1.msra.mxu0 0.0
  %713 = vmatprep.subr.mxu0 0.0
  %714 = vmatpush1.msra.mxu0 0.0
  %715 = vmatprep.subr.mxu0 0.0
  %716 = vmatpush1.msra.mxu0 0.0
  %717 = vmatprep.subr.mxu0 0.0
  %718 = vmatpush1.msra.mxu0 0.0
  %719 = vmatprep.mubr.f32.mxu0 0.0
  %720 = vmatmul.mubr.f32.gmra.mrb[0].mxu0 %v620
  %v721 = vpop.f32.mrb[0].mxu0
  %v722 = vadd.f32 %v561, %v721
  %v723 = vpop.f32.mrb[0].mxu0
  %724 = vmatprep.mubr.f32.mxu0 0.0
  %725 = vmatmul.mubr.f32.gmra.mrb[0].mxu0 %v623
  %v726 = vpop.f32.mrb[0].mxu0
  %v727 = vadd.f32 %v566, %v726
  %v728 = vpop.f32.mrb[0].mxu0
  %729 = vmatprep.mubr.f32.mxu0 0.0
  %730 = vmatmul.mubr.f32.gmra.mrb[0].mxu0 %v626
  %v731 = vpop.f32.mrb[0].mxu0
  %v732 = vadd.f32 %v571, %v731
  %v733 = vpop.f32.mrb[0].mxu0
  %734 = vmatprep.mubr.f32.mxu0 0.0
  %735 = vmatmul.mubr.f32.gmra.mrb[0].mxu0 %v629
  %v736 = vpop.f32.mrb[0].mxu0
  %v737 = vadd.f32 %v576, %v736
  %v738 = vpop.f32.mrb[0].mxu0
  %739 = vmatprep.mubr.f32.mxu0 0.0
  %740 = vmatmul.mubr.f32.gmra.mrb[0].mxu0 %v632
  %v741 = vpop.f32.mrb[0].mxu0
  %v742 = vadd.f32 %v581, %v741
  %v743 = vpop.f32.mrb[0].mxu0
  %744 = vmatprep.mubr.f32.mxu0 0.0
  %745 = vmatmul.mubr.f32.gmra.mrb[0].mxu0 %v635
  %v746 = vpop.f32.mrb[0].mxu0
  %v747 = vadd.f32 %v586, %v746
  %v748 = vpop.f32.mrb[0].mxu0
  %749 = vmatprep.mubr.f32.mxu0 0.0
  %750 = vmatmul.mubr.f32.gmra.mrb[0].mxu0 %v638
  %v751 = vpop.f32.mrb[0].mxu0
  %v752 = vadd.f32 %v591, %v751
  %v753 = vpop.f32.mrb[0].mxu0
  %754 = vmatprep.mubr.f32.mxu0 0.0
  %755 = vmatmul.mubr.f32.gmra.mrb[0].mxu0 %v641
  %v756 = vpop.f32.mrb[0].mxu0
  %v757 = vadd.f32 %v596, %v756
  %v758 = vpop.f32.mrb[0].mxu0
  %759 = vmatprep.mubr.f32.mxu0 0.0
  %760 = vmatmul.mubr.f32.gmra.mrb[0].mxu0 %v644
  %v761 = vpop.f32.mrb[0].mxu0
  %v762 = vadd.f32 %v601, %v761
  %v763 = vpop.f32.mrb[0].mxu0
  %764 = vmatprep.mubr.f32.mxu0 0.0
  %765 = vmatmul.mubr.f32.gmra.mrb[0].mxu0 %v647
  %v766 = vpop.f32.mrb[0].mxu0
  %v767 = vadd.f32 %v606, %v766
  %v768 = vpop.f32.mrb[0].mxu0
  %769 = vmatprep.mubr.f32.mxu0 0.0
  %770 = vmatmul.mubr.f32.gmra.mrb[0].mxu0 %v650
  %v771 = vpop.f32.mrb[0].mxu0
  %v772 = vadd.f32 %v611, %v771
  %v773 = vpop.f32.mrb[0].mxu0
  %774 = vmatprep.mubr.f32.mxu0 0.0
  %775 = vmatmul.mubr.f32.gmra.mrb[0].mxu0 %v653
  %v776 = vpop.f32.mrb[0].mxu0
  %v777 = vadd.f32 %v616, %v776
  %v778 = vpop.f32.mrb[0].mxu0
  %779 = vdwg.mxu0
  %v781 = vsel %vm457, %v68, 0
  %v784 = vsel %vm457, %v69, 0
  %v787 = vsel %vm457, %v70, 0
  %v790 = vsel %vm457, %v71, 0
  %v793 = vsel %vm457, %v72, 0
  %v796 = vsel %vm457, %v73, 0
  %v799 = vsel %vm457, %v74, 0
  %v802 = vsel %vm457, %v75, 0
  %v805 = vsel %vm457, %v76, 0
  %v808 = vsel %vm457, %v77, 0
  %v811 = vsel %vm457, %v78, 0
  %v814 = vsel %vm457, %v79, 0
  %816 = vmatprep.subr.mxu0 0.0
  %817 = vmatpush1.msra.mxu0 %v364
  %818 = vmatprep.subr.mxu0 0.0
  %819 = vmatpush1.msra.mxu0 %v369
  %820 = vmatprep.subr.mxu0 0.0
  %821 = vmatpush1.msra.mxu0 %v374
  %822 = vmatprep.subr.mxu0 0.0
  %823 = vmatpush1.msra.mxu0 %v379
  %824 = vmatprep.subr.mxu0 0.0
  %825 = vmatpush1.msra.mxu0 0.0
  %826 = vmatprep.subr.mxu0 0.0
  %827 = vmatpush1.msra.mxu0 0.0
  %828 = vmatprep.subr.mxu0 0.0
  %829 = vmatpush1.msra.mxu0 0.0
  %830 = vmatprep.subr.mxu0 0.0
  %831 = vmatpush1.msra.mxu0 0.0
  %832 = vmatprep.subr.mxu0 0.0
  %833 = vmatpush1.msra.mxu0 0.0
  %834 = vmatprep.subr.mxu0 0.0
  %835 = vmatpush1.msra.mxu0 0.0
  %836 = vmatprep.subr.mxu0 0.0
  %837 = vmatpush1.msra.mxu0 0.0
  %838 = vmatprep.subr.mxu0 0.0
  %839 = vmatpush1.msra.mxu0 0.0
  %840 = vmatprep.subr.mxu0 0.0
  %841 = vmatpush1.msra.mxu0 0.0
  %842 = vmatprep.subr.mxu0 0.0
  %843 = vmatpush1.msra.mxu0 0.0
  %844 = vmatprep.subr.mxu0 0.0
  %845 = vmatpush1.msra.mxu0 0.0
  %846 = vmatprep.subr.mxu0 0.0
  %847 = vmatpush1.msra.mxu0 0.0
  %848 = vmatprep.subr.mxu0 0.0
  %849 = vmatpush1.msra.mxu0 0.0
  %850 = vmatprep.subr.mxu0 0.0
  %851 = vmatpush1.msra.mxu0 0.0
  %852 = vmatprep.subr.mxu0 0.0
  %853 = vmatpush1.msra.mxu0 0.0
  %854 = vmatprep.subr.mxu0 0.0
  %855 = vmatpush1.msra.mxu0 0.0
  %856 = vmatprep.subr.mxu0 0.0
  %857 = vmatpush1.msra.mxu0 0.0
  %858 = vmatprep.subr.mxu0 0.0
  %859 = vmatpush1.msra.mxu0 0.0
  %860 = vmatprep.subr.mxu0 0.0
  %861 = vmatpush1.msra.mxu0 0.0
  %862 = vmatprep.subr.mxu0 0.0
  %863 = vmatpush1.msra.mxu0 0.0
  %864 = vmatprep.subr.mxu0 0.0
  %865 = vmatpush1.msra.mxu0 0.0
  %866 = vmatprep.subr.mxu0 0.0
  %867 = vmatpush1.msra.mxu0 0.0
  %868 = vmatprep.subr.mxu0 0.0
  %869 = vmatpush1.msra.mxu0 0.0
  %870 = vmatprep.subr.mxu0 0.0
  %871 = vmatpush1.msra.mxu0 0.0
  %872 = vmatprep.subr.mxu0 0.0
  %873 = vmatpush1.msra.mxu0 0.0
  %874 = vmatprep.subr.mxu0 0.0
  %875 = vmatpush1.msra.mxu0 0.0
  %876 = vmatprep.subr.mxu0 0.0
  %877 = vmatpush1.msra.mxu0 0.0
  %878 = vmatprep.subr.mxu0 0.0
  %879 = vmatpush1.msra.mxu0 0.0
  %880 = vmatprep.mubr.f32.mxu0 0.0
  %881 = vmatmul.mubr.f32.gmra.mrb[0].mxu0 %v781
  %v882 = vpop.f32.mrb[0].mxu0
  %v883 = vadd.f32 0.0, %v882
  %v884 = vpop.f32.mrb[0].mxu0
  %885 = vmatprep.mubr.f32.mxu0 0.0
  %886 = vmatmul.mubr.f32.gmra.mrb[0].mxu0 %v784
  %v887 = vpop.f32.mrb[0].mxu0
  %v888 = vadd.f32 0.0, %v887
  %v889 = vpop.f32.mrb[0].mxu0
  %890 = vmatprep.mubr.f32.mxu0 0.0
  %891 = vmatmul.mubr.f32.gmra.mrb[0].mxu0 %v787
  %v892 = vpop.f32.mrb[0].mxu0
  %v893 = vadd.f32 0.0, %v892
  %v894 = vpop.f32.mrb[0].mxu0
  %895 = vmatprep.mubr.f32.mxu0 0.0
  %896 = vmatmul.mubr.f32.gmra.mrb[0].mxu0 %v790
  %v897 = vpop.f32.mrb[0].mxu0
  %v898 = vadd.f32 0.0, %v897
  %v899 = vpop.f32.mrb[0].mxu0
  %900 = vmatprep.mubr.f32.mxu0 0.0
  %901 = vmatmul.mubr.f32.gmra.mrb[0].mxu0 %v793
  %v902 = vpop.f32.mrb[0].mxu0
  %v903 = vadd.f32 0.0, %v902
  %v904 = vpop.f32.mrb[0].mxu0
  %905 = vmatprep.mubr.f32.mxu0 0.0
  %906 = vmatmul.mubr.f32.gmra.mrb[0].mxu0 %v796
  %v907 = vpop.f32.mrb[0].mxu0
  %v908 = vadd.f32 0.0, %v907
  %v909 = vpop.f32.mrb[0].mxu0
  %910 = vmatprep.mubr.f32.mxu0 0.0
  %911 = vmatmul.mubr.f32.gmra.mrb[0].mxu0 %v799
  %v912 = vpop.f32.mrb[0].mxu0
  %v913 = vadd.f32 0.0, %v912
  %v914 = vpop.f32.mrb[0].mxu0
  %915 = vmatprep.mubr.f32.mxu0 0.0
  %916 = vmatmul.mubr.f32.gmra.mrb[0].mxu0 %v802
  %v917 = vpop.f32.mrb[0].mxu0
  %v918 = vadd.f32 0.0, %v917
  %v919 = vpop.f32.mrb[0].mxu0
  %920 = vmatprep.mubr.f32.mxu0 0.0
  %921 = vmatmul.mubr.f32.gmra.mrb[0].mxu0 %v805
  %v922 = vpop.f32.mrb[0].mxu0
  %v923 = vadd.f32 0.0, %v922
  %v924 = vpop.f32.mrb[0].mxu0
  %925 = vmatprep.mubr.f32.mxu0 0.0
  %926 = vmatmul.mubr.f32.gmra.mrb[0].mxu0 %v808
  %v927 = vpop.f32.mrb[0].mxu0
  %v928 = vadd.f32 0.0, %v927
  %v929 = vpop.f32.mrb[0].mxu0
  %930 = vmatprep.mubr.f32.mxu0 0.0
  %931 = vmatmul.mubr.f32.gmra.mrb[0].mxu0 %v811
  %v932 = vpop.f32.mrb[0].mxu0
  %v933 = vadd.f32 0.0, %v932
  %v934 = vpop.f32.mrb[0].mxu0
  %935 = vmatprep.mubr.f32.mxu0 0.0
  %936 = vmatmul.mubr.f32.gmra.mrb[0].mxu0 %v814
  %v937 = vpop.f32.mrb[0].mxu0
  %v938 = vadd.f32 0.0, %v937
  %v939 = vpop.f32.mrb[0].mxu0
  %940 = vdwg.mxu0
  %v941 = vadd.f32 %v722, %v883
  %v942 = vadd.f32 %v727, %v888
  %v943 = vadd.f32 %v732, %v893
  %v944 = vadd.f32 %v737, %v898
  %v945 = vadd.f32 %v742, %v903
  %v946 = vadd.f32 %v747, %v908
  %v947 = vadd.f32 %v752, %v913
  %v948 = vadd.f32 %v757, %v918
  %v949 = vadd.f32 %v762, %v923
  %v950 = vadd.f32 %v767, %v928
  %v951 = vadd.f32 %v772, %v933
  %v952 = vadd.f32 %v777, %v938
  %v954 = vsel %vm99, %v80, 0
  %v957 = vsel %vm99, %v81, 0
  %v960 = vsel %vm99, %v82, 0
  %v963 = vsel %vm99, %v83, 0
  %v966 = vsel %vm99, %v84, 0
  %v969 = vsel %vm99, %v85, 0
  %v972 = vsel %vm99, %v86, 0
  %v975 = vsel %vm99, %v87, 0
  %v978 = vsel %vm99, %v88, 0
  %v981 = vsel %vm99, %v89, 0
  %v984 = vsel %vm99, %v90, 0
  %v987 = vsel %vm99, %v91, 0
  %989 = vmatprep.subr.mxu0 0.0
  %990 = vmatpush1.msra.mxu0 %v453
  %991 = vmatprep.subr.mxu0 0.0
  %992 = vmatpush1.msra.mxu0 0.0
  %993 = vmatprep.subr.mxu0 0.0
  %994 = vmatpush1.msra.mxu0 0.0
  %995 = vmatprep.subr.mxu0 0.0
  %996 = vmatpush1.msra.mxu0 0.0
  %997 = vmatprep.subr.mxu0 0.0
  %998 = vmatpush1.msra.mxu0 0.0
  %999 = vmatprep.subr.mxu0 0.0
  %1000 = vmatpush1.msra.mxu0 0.0
  %1001 = vmatprep.subr.mxu0 0.0
  %1002 = vmatpush1.msra.mxu0 0.0
  %1003 = vmatprep.subr.mxu0 0.0
  %1004 = vmatpush1.msra.mxu0 0.0
  %1005 = vmatprep.subr.mxu0 0.0
  %1006 = vmatpush1.msra.mxu0 0.0
  %1007 = vmatprep.subr.mxu0 0.0
  %1008 = vmatpush1.msra.mxu0 0.0
  %1009 = vmatprep.subr.mxu0 0.0
  %1010 = vmatpush1.msra.mxu0 0.0
  %1011 = vmatprep.subr.mxu0 0.0
  %1012 = vmatpush1.msra.mxu0 0.0
  %1013 = vmatprep.subr.mxu0 0.0
  %1014 = vmatpush1.msra.mxu0 0.0
  %1015 = vmatprep.subr.mxu0 0.0
  %1016 = vmatpush1.msra.mxu0 0.0
  %1017 = vmatprep.subr.mxu0 0.0
  %1018 = vmatpush1.msra.mxu0 0.0
  %1019 = vmatprep.subr.mxu0 0.0
  %1020 = vmatpush1.msra.mxu0 0.0
  %1021 = vmatprep.subr.mxu0 0.0
  %1022 = vmatpush1.msra.mxu0 0.0
  %1023 = vmatprep.subr.mxu0 0.0
  %1024 = vmatpush1.msra.mxu0 0.0
  %1025 = vmatprep.subr.mxu0 0.0
  %1026 = vmatpush1.msra.mxu0 0.0
  %1027 = vmatprep.subr.mxu0 0.0
  %1028 = vmatpush1.msra.mxu0 0.0
  %1029 = vmatprep.subr.mxu0 0.0
  %1030 = vmatpush1.msra.mxu0 0.0
  %1031 = vmatprep.subr.mxu0 0.0
  %1032 = vmatpush1.msra.mxu0 0.0
  %1033 = vmatprep.subr.mxu0 0.0
  %1034 = vmatpush1.msra.mxu0 0.0
  %1035 = vmatprep.subr.mxu0 0.0
  %1036 = vmatpush1.msra.mxu0 0.0
  %1037 = vmatprep.subr.mxu0 0.0
  %1038 = vmatpush1.msra.mxu0 0.0
  %1039 = vmatprep.subr.mxu0 0.0
  %1040 = vmatpush1.msra.mxu0 0.0
  %1041 = vmatprep.subr.mxu0 0.0
  %1042 = vmatpush1.msra.mxu0 0.0
  %1043 = vmatprep.subr.mxu0 0.0
  %1044 = vmatpush1.msra.mxu0 0.0
  %1045 = vmatprep.subr.mxu0 0.0
  %1046 = vmatpush1.msra.mxu0 0.0
  %1047 = vmatprep.subr.mxu0 0.0
  %1048 = vmatpush1.msra.mxu0 0.0
  %1049 = vmatprep.subr.mxu0 0.0
  %1050 = vmatpush1.msra.mxu0 0.0
  %1051 = vmatprep.subr.mxu0 0.0
  %1052 = vmatpush1.msra.mxu0 0.0
  %1053 = vmatprep.mubr.f32.mxu0 0.0
  %1054 = vmatmul.mubr.f32.gmra.mrb[0].mxu0 %v954
  %v1055 = vpop.f32.mrb[0].mxu0
  %v1056 = vadd.f32 0.0, %v1055
  %v1057 = vpop.f32.mrb[0].mxu0
  %1058 = vmatprep.mubr.f32.mxu0 0.0
  %1059 = vmatmul.mubr.f32.gmra.mrb[0].mxu0 %v957
  %v1060 = vpop.f32.mrb[0].mxu0
  %v1061 = vadd.f32 0.0, %v1060
  %v1062 = vpop.f32.mrb[0].mxu0
  %1063 = vmatprep.mubr.f32.mxu0 0.0
  %1064 = vmatmul.mubr.f32.gmra.mrb[0].mxu0 %v960
  %v1065 = vpop.f32.mrb[0].mxu0
  %v1066 = vadd.f32 0.0, %v1065
  %v1067 = vpop.f32.mrb[0].mxu0
  %1068 = vmatprep.mubr.f32.mxu0 0.0
  %1069 = vmatmul.mubr.f32.gmra.mrb[0].mxu0 %v963
  %v1070 = vpop.f32.mrb[0].mxu0
  %v1071 = vadd.f32 0.0, %v1070
  %v1072 = vpop.f32.mrb[0].mxu0
  %1073 = vmatprep.mubr.f32.mxu0 0.0
  %1074 = vmatmul.mubr.f32.gmra.mrb[0].mxu0 %v966
  %v1075 = vpop.f32.mrb[0].mxu0
  %v1076 = vadd.f32 0.0, %v1075
  %v1077 = vpop.f32.mrb[0].mxu0
  %1078 = vmatprep.mubr.f32.mxu0 0.0
  %1079 = vmatmul.mubr.f32.gmra.mrb[0].mxu0 %v969
  %v1080 = vpop.f32.mrb[0].mxu0
  %v1081 = vadd.f32 0.0, %v1080
  %v1082 = vpop.f32.mrb[0].mxu0
  %1083 = vmatprep.mubr.f32.mxu0 0.0
  %1084 = vmatmul.mubr.f32.gmra.mrb[0].mxu0 %v972
  %v1085 = vpop.f32.mrb[0].mxu0
  %v1086 = vadd.f32 0.0, %v1085
  %v1087 = vpop.f32.mrb[0].mxu0
  %1088 = vmatprep.mubr.f32.mxu0 0.0
  %1089 = vmatmul.mubr.f32.gmra.mrb[0].mxu0 %v975
  %v1090 = vpop.f32.mrb[0].mxu0
  %v1091 = vadd.f32 0.0, %v1090
  %v1092 = vpop.f32.mrb[0].mxu0
  %1093 = vmatprep.mubr.f32.mxu0 0.0
  %1094 = vmatmul.mubr.f32.gmra.mrb[0].mxu0 %v978
  %v1095 = vpop.f32.mrb[0].mxu0
  %v1096 = vadd.f32 0.0, %v1095
  %v1097 = vpop.f32.mrb[0].mxu0
  %1098 = vmatprep.mubr.f32.mxu0 0.0
  %1099 = vmatmul.mubr.f32.gmra.mrb[0].mxu0 %v981
  %v1100 = vpop.f32.mrb[0].mxu0
  %v1101 = vadd.f32 0.0, %v1100
  %v1102 = vpop.f32.mrb[0].mxu0
  %1103 = vmatprep.mubr.f32.mxu0 0.0
  %1104 = vmatmul.mubr.f32.gmra.mrb[0].mxu0 %v984
  %v1105 = vpop.f32.mrb[0].mxu0
  %v1106 = vadd.f32 0.0, %v1105
  %v1107 = vpop.f32.mrb[0].mxu0
  %1108 = vmatprep.mubr.f32.mxu0 0.0
  %1109 = vmatmul.mubr.f32.gmra.mrb[0].mxu0 %v987
  %v1110 = vpop.f32.mrb[0].mxu0
  %v1111 = vadd.f32 0.0, %v1110
  %v1112 = vpop.f32.mrb[0].mxu0
  %1113 = vdwg.mxu0
  %v1114 = vadd.f32 %v941, %v1056
  %v1115 = vadd.f32 %v942, %v1061
  %v1116 = vadd.f32 %v943, %v1066
  %v1117 = vadd.f32 %v944, %v1071
  %v1118 = vadd.f32 %v945, %v1076
  %v1119 = vadd.f32 %v946, %v1081
  %v1120 = vadd.f32 %v947, %v1086
  %v1121 = vadd.f32 %v948, %v1091
  %v1122 = vadd.f32 %v949, %v1096
  %v1123 = vadd.f32 %v950, %v1101
  %v1124 = vadd.f32 %v951, %v1106
  %v1125 = vadd.f32 %v952, %v1111
  %v1126 = vld [vmem:[%s8 + $0x88] sm:$0x1]
  %v1127 = vlaneseq
  %v1128 = vshrl.u32 %v1127, 7
  %v1129 = vsub.s32 0, %v1128
  %v1130 = vrot.slane %v1126, %v1129
  %v1131 = vadd.f32 %v1114, %v1130
  %v1132 = vadd.f32 %v1115, %v1130
  %v1133 = vadd.f32 %v1116, %v1130
  %v1134 = vadd.f32 %v1117, %v1130
  %v1135 = vadd.f32 %v1118, %v1130
  %v1136 = vadd.f32 %v1119, %v1130
  %v1137 = vadd.f32 %v1120, %v1130
  %v1138 = vadd.f32 %v1121, %v1130
  %v1139 = vadd.f32 %v1122, %v1130
  %v1140 = vadd.f32 %v1123, %v1130
  %v1141 = vadd.f32 %v1124, %v1130
  %v1142 = vadd.f32 %v1125, %v1130
  %v1143 = vmax.f32 %v1131, 0.0
  %v1144 = vmax.f32 %v1132, 0.0
  %v1145 = vmax.f32 %v1133, 0.0
  %v1146 = vmax.f32 %v1134, 0.0
  %v1147 = vmax.f32 %v1135, 0.0
  %v1148 = vmax.f32 %v1136, 0.0
  %v1149 = vmax.f32 %v1137, 0.0
  %v1150 = vmax.f32 %v1138, 0.0
  %v1151 = vmax.f32 %v1139, 0.0
  %v1152 = vmax.f32 %v1140, 0.0
  %v1153 = vmax.f32 %v1141, 0.0
  %v1154 = vmax.f32 %v1142, 0.0
  %v1155 = vld [vmem:[%s9] sm:$0xff]
  %v1156 = vld [vmem:[%s9 + $0x8] sm:$0xff]
  %v1157 = vld [vmem:[%s9 + $0x10] sm:$0xff]
  %v1158 = vld [vmem:[%s9 + $0x18] sm:$0xff]
  %v1159 = vld [vmem:[%s9 + $0x60] sm:$0x1]
  %v1160 = vlaneseq
  %v1161 = vshrl.u32 %v1160, 7
  %v1162 = vsub.s32 0, %v1161
  %v1163 = vrot.slane %v1159, %v1162
  %v1165 = vsel %vm457, %v1143, 0
  %v1168 = vsel %vm457, %v1144, 0
  %v1171 = vsel %vm457, %v1145, 0
  %v1174 = vsel %vm457, %v1146, 0
  %v1177 = vsel %vm457, %v1147, 0
  %v1180 = vsel %vm457, %v1148, 0
  %v1183 = vsel %vm457, %v1149, 0
  %v1186 = vsel %vm457, %v1150, 0
  %v1189 = vsel %vm457, %v1151, 0
  %v1192 = vsel %vm457, %v1152, 0
  %v1195 = vsel %vm457, %v1153, 0
  %v1198 = vsel %vm457, %v1154, 0
  %1200 = vmatprep.subr.mxu0 0.0
  %1201 = vmatpush1.msra.mxu0 %v1155
  %1202 = vmatprep.subr.mxu0 0.0
  %1203 = vmatpush1.msra.mxu0 %v1156
  %1204 = vmatprep.subr.mxu0 0.0
  %1205 = vmatpush1.msra.mxu0 %v1157
  %1206 = vmatprep.subr.mxu0 0.0
  %1207 = vmatpush1.msra.mxu0 %v1158
  %1208 = vmatprep.subr.mxu0 0.0
  %1209 = vmatpush1.msra.mxu0 0.0
  %1210 = vmatprep.subr.mxu0 0.0
  %1211 = vmatpush1.msra.mxu0 0.0
  %1212 = vmatprep.subr.mxu0 0.0
  %1213 = vmatpush1.msra.mxu0 0.0
  %1214 = vmatprep.subr.mxu0 0.0
  %1215 = vmatpush1.msra.mxu0 0.0
  %1216 = vmatprep.subr.mxu0 0.0
  %1217 = vmatpush1.msra.mxu0 0.0
  %1218 = vmatprep.subr.mxu0 0.0
  %1219 = vmatpush1.msra.mxu0 0.0
  %1220 = vmatprep.subr.mxu0 0.0
  %1221 = vmatpush1.msra.mxu0 0.0
  %1222 = vmatprep.subr.mxu0 0.0
  %1223 = vmatpush1.msra.mxu0 0.0
  %1224 = vmatprep.subr.mxu0 0.0
  %1225 = vmatpush1.msra.mxu0 0.0
  %1226 = vmatprep.subr.mxu0 0.0
  %1227 = vmatpush1.msra.mxu0 0.0
  %1228 = vmatprep.subr.mxu0 0.0
  %1229 = vmatpush1.msra.mxu0 0.0
  %1230 = vmatprep.subr.mxu0 0.0
  %1231 = vmatpush1.msra.mxu0 0.0
  %1232 = vmatprep.subr.mxu0 0.0
  %1233 = vmatpush1.msra.mxu0 0.0
  %1234 = vmatprep.subr.mxu0 0.0
  %1235 = vmatpush1.msra.mxu0 0.0
  %1236 = vmatprep.subr.mxu0 0.0
  %1237 = vmatpush1.msra.mxu0 0.0
  %1238 = vmatprep.subr.mxu0 0.0
  %1239 = vmatpush1.msra.mxu0 0.0
  %1240 = vmatprep.subr.mxu0 0.0
  %1241 = vmatpush1.msra.mxu0 0.0
  %1242 = vmatprep.subr.mxu0 0.0
  %1243 = vmatpush1.msra.mxu0 0.0
  %1244 = vmatprep.subr.mxu0 0.0
  %1245 = vmatpush1.msra.mxu0 0.0
  %1246 = vmatprep.subr.mxu0 0.0
  %1247 = vmatpush1.msra.mxu0 0.0
  %1248 = vmatprep.subr.mxu0 0.0
  %1249 = vmatpush1.msra.mxu0 0.0
  %1250 = vmatprep.subr.mxu0 0.0
  %1251 = vmatpush1.msra.mxu0 0.0
  %1252 = vmatprep.subr.mxu0 0.0
  %1253 = vmatpush1.msra.mxu0 0.0
  %1254 = vmatprep.subr.mxu0 0.0
  %1255 = vmatpush1.msra.mxu0 0.0
  %1256 = vmatprep.subr.mxu0 0.0
  %1257 = vmatpush1.msra.mxu0 0.0
  %1258 = vmatprep.subr.mxu0 0.0
  %1259 = vmatpush1.msra.mxu0 0.0
  %1260 = vmatprep.subr.mxu0 0.0
  %1261 = vmatpush1.msra.mxu0 0.0
  %1262 = vmatprep.subr.mxu0 0.0
  %1263 = vmatpush1.msra.mxu0 0.0
  %1264 = vmatprep.mubr.f32.mxu0 0.0
  %1265 = vmatmul.mubr.f32.gmra.mrb[0].mxu0 %v1165
  %v1266 = vpop.f32.mrb[0].mxu0
  %v1267 = vadd.f32 %v1163, %v1266
  %v1268 = vpop.f32.mrb[0].mxu0
  %1269 = vmatprep.mubr.f32.mxu0 0.0
  %1270 = vmatmul.mubr.f32.gmra.mrb[0].mxu0 %v1168
  %v1271 = vpop.f32.mrb[0].mxu0
  %v1272 = vadd.f32 %v1163, %v1271
  %v1273 = vpop.f32.mrb[0].mxu0
  %1274 = vmatprep.mubr.f32.mxu0 0.0
  %1275 = vmatmul.mubr.f32.gmra.mrb[0].mxu0 %v1171
  %v1276 = vpop.f32.mrb[0].mxu0
  %v1277 = vadd.f32 %v1163, %v1276
  %v1278 = vpop.f32.mrb[0].mxu0
  %1279 = vmatprep.mubr.f32.mxu0 0.0
  %1280 = vmatmul.mubr.f32.gmra.mrb[0].mxu0 %v1174
  %v1281 = vpop.f32.mrb[0].mxu0
  %v1282 = vadd.f32 %v1163, %v1281
  %v1283 = vpop.f32.mrb[0].mxu0
  %1284 = vmatprep.mubr.f32.mxu0 0.0
  %1285 = vmatmul.mubr.f32.gmra.mrb[0].mxu0 %v1177
  %v1286 = vpop.f32.mrb[0].mxu0
  %v1287 = vadd.f32 %v1163, %v1286
  %v1288 = vpop.f32.mrb[0].mxu0
  %1289 = vmatprep.mubr.f32.mxu0 0.0
  %1290 = vmatmul.mubr.f32.gmra.mrb[0].mxu0 %v1180
  %v1291 = vpop.f32.mrb[0].mxu0
  %v1292 = vadd.f32 %v1163, %v1291
  %v1293 = vpop.f32.mrb[0].mxu0
  %1294 = vmatprep.mubr.f32.mxu0 0.0
  %1295 = vmatmul.mubr.f32.gmra.mrb[0].mxu0 %v1183
  %v1296 = vpop.f32.mrb[0].mxu0
  %v1297 = vadd.f32 %v1163, %v1296
  %v1298 = vpop.f32.mrb[0].mxu0
  %1299 = vmatprep.mubr.f32.mxu0 0.0
  %1300 = vmatmul.mubr.f32.gmra.mrb[0].mxu0 %v1186
  %v1301 = vpop.f32.mrb[0].mxu0
  %v1302 = vadd.f32 %v1163, %v1301
  %v1303 = vpop.f32.mrb[0].mxu0
  %1304 = vmatprep.mubr.f32.mxu0 0.0
  %1305 = vmatmul.mubr.f32.gmra.mrb[0].mxu0 %v1189
  %v1306 = vpop.f32.mrb[0].mxu0
  %v1307 = vadd.f32 %v1163, %v1306
  %v1308 = vpop.f32.mrb[0].mxu0
  %1309 = vmatprep.mubr.f32.mxu0 0.0
  %1310 = vmatmul.mubr.f32.gmra.mrb[0].mxu0 %v1192
  %v1311 = vpop.f32.mrb[0].mxu0
  %v1312 = vadd.f32 %v1163, %v1311
  %v1313 = vpop.f32.mrb[0].mxu0
  %1314 = vmatprep.mubr.f32.mxu0 0.0
  %1315 = vmatmul.mubr.f32.gmra.mrb[0].mxu0 %v1195
  %v1316 = vpop.f32.mrb[0].mxu0
  %v1317 = vadd.f32 %v1163, %v1316
  %v1318 = vpop.f32.mrb[0].mxu0
  %1319 = vmatprep.mubr.f32.mxu0 0.0
  %1320 = vmatmul.mubr.f32.gmra.mrb[0].mxu0 %v1198
  %v1321 = vpop.f32.mrb[0].mxu0
  %v1322 = vadd.f32 %v1163, %v1321
  %v1323 = vpop.f32.mrb[0].mxu0
  %1324 = vdwg.mxu0
  %1325 = vxpose.xlu0.b32.start [1/16] %v68, 128
  %1326 = vxpose.xlu0.b32.cont [2/16] %v69, 128
  %1327 = vxpose.xlu0.b32.cont [3/16] %v70, 128
  %1328 = vxpose.xlu0.b32.cont [4/16] %v71, 128
  %1329 = vxpose.xlu0.b32.cont [5/16] %v72, 128
  %1330 = vxpose.xlu0.b32.cont [6/16] %v73, 128
  %1331 = vxpose.xlu0.b32.cont [7/16] %v74, 128
  %1332 = vxpose.xlu0.b32.cont [8/16] %v75, 128
  %1333 = vxpose.xlu0.b32.cont [9/16] %v76, 128
  %1334 = vxpose.xlu0.b32.cont [10/16] %v77, 128
  %1335 = vxpose.xlu0.b32.cont [11/16] %v78, 128
  %1336 = vxpose.xlu0.b32.cont [12/16] %v79, 128
  %1337 = vxpose.xlu0.b32.cont [13/16] 0.0, 128
  %1338 = vxpose.xlu0.b32.cont [14/16] 0.0, 128
  %1339 = vxpose.xlu0.b32.cont [15/16] 0.0, 128
  %1340 = vxpose.xlu0.b32.end [16/16] 0.0, 128
  %v1341 = vpop.trf.xlu0
  %v1342 = vpop.trf.xlu0
  %v1343 = vpop.trf.xlu0
  %v1344 = vpop.trf.xlu0
  %v1345 = vpop.trf.xlu0
  %v1346 = vpop.trf.xlu0
  %v1347 = vpop.trf.xlu0
  %v1348 = vpop.trf.xlu0
  %v1349 = vpop.trf.xlu0
  %v1350 = vpop.trf.xlu0
  %v1351 = vpop.trf.xlu0
  %v1352 = vpop.trf.xlu0
  %v1353 = vpop.trf.xlu0
  %v1354 = vpop.trf.xlu0
  %v1355 = vpop.trf.xlu0
  %v1356 = vpop.trf.xlu0
  %vm1357 = vcmask 785408
  %v1359 = vsel %vm1357, %v1341, 0
  %v1362 = vsel %vm1357, %v1342, 0
  %v1365 = vsel %vm1357, %v1343, 0
  %v1368 = vsel %vm1357, %v1344, 0
  %1370 = vmatprep.subr.mxu0 0.0
  %1371 = vmatpush1.msra.mxu0 %v1267
  %1372 = vmatprep.subr.mxu0 0.0
  %1373 = vmatpush1.msra.mxu0 %v1272
  %1374 = vmatprep.subr.mxu0 0.0
  %1375 = vmatpush1.msra.mxu0 %v1277
  %1376 = vmatprep.subr.mxu0 0.0
  %1377 = vmatpush1.msra.mxu0 %v1282
  %1378 = vmatprep.subr.mxu0 0.0
  %1379 = vmatpush1.msra.mxu0 %v1287
  %1380 = vmatprep.subr.mxu0 0.0
  %1381 = vmatpush1.msra.mxu0 %v1292
  %1382 = vmatprep.subr.mxu0 0.0
  %1383 = vmatpush1.msra.mxu0 %v1297
  %1384 = vmatprep.subr.mxu0 0.0
  %1385 = vmatpush1.msra.mxu0 %v1302
  %1386 = vmatprep.subr.mxu0 0.0
  %1387 = vmatpush1.msra.mxu0 %v1307
  %1388 = vmatprep.subr.mxu0 0.0
  %1389 = vmatpush1.msra.mxu0 %v1312
  %1390 = vmatprep.subr.mxu0 0.0
  %1391 = vmatpush1.msra.mxu0 %v1317
  %1392 = vmatprep.subr.mxu0 0.0
  %1393 = vmatpush1.msra.mxu0 %v1322
  %1394 = vmatprep.subr.mxu0 0.0
  %1395 = vmatpush1.msra.mxu0 0.0
  %1396 = vmatprep.subr.mxu0 0.0
  %1397 = vmatpush1.msra.mxu0 0.0
  %1398 = vmatprep.subr.mxu0 0.0
  %1399 = vmatpush1.msra.mxu0 0.0
  %1400 = vmatprep.subr.mxu0 0.0
  %1401 = vmatpush1.msra.mxu0 0.0
  %1402 = vmatprep.subr.mxu0 0.0
  %1403 = vmatpush1.msra.mxu0 0.0
  %1404 = vmatprep.subr.mxu0 0.0
  %1405 = vmatpush1.msra.mxu0 0.0
  %1406 = vmatprep.subr.mxu0 0.0
  %1407 = vmatpush1.msra.mxu0 0.0
  %1408 = vmatprep.subr.mxu0 0.0
  %1409 = vmatpush1.msra.mxu0 0.0
  %1410 = vmatprep.subr.mxu0 0.0
  %1411 = vmatpush1.msra.mxu0 0.0
  %1412 = vmatprep.subr.mxu0 0.0
  %1413 = vmatpush1.msra.mxu0 0.0
  %1414 = vmatprep.subr.mxu0 0.0
  %1415 = vmatpush1.msra.mxu0 0.0
  %1416 = vmatprep.subr.mxu0 0.0
  %1417 = vmatpush1.msra.mxu0 0.0
  %1418 = vmatprep.subr.mxu0 0.0
  %1419 = vmatpush1.msra.mxu0 0.0
  %1420 = vmatprep.subr.mxu0 0.0
  %1421 = vmatpush1.msra.mxu0 0.0
  %1422 = vmatprep.subr.mxu0 0.0
  %1423 = vmatpush1.msra.mxu0 0.0
  %1424 = vmatprep.subr.mxu0 0.0
  %1425 = vmatpush1.msra.mxu0 0.0
  %1426 = vmatprep.subr.mxu0 0.0
  %1427 = vmatpush1.msra.mxu0 0.0
  %1428 = vmatprep.subr.mxu0 0.0
  %1429 = vmatpush1.msra.mxu0 0.0
  %1430 = vmatprep.subr.mxu0 0.0
  %1431 = vmatpush1.msra.mxu0 0.0
  %1432 = vmatprep.subr.mxu0 0.0
  %1433 = vmatpush1.msra.mxu0 0.0
  %1434 = vmatprep.mubr.f32.mxu0 0.0
  %1435 = vmatmul.mubr.f32.gmra.mrb[0].mxu0 %v1359
  %v1436 = vpop.f32.mrb[0].mxu0
  %v1437 = vadd.f32 0.0, %v1436
  %v1438 = vpop.f32.mrb[0].mxu0
  %1439 = vmatprep.mubr.f32.mxu0 0.0
  %1440 = vmatmul.mubr.f32.gmra.mrb[0].mxu0 %v1362
  %v1441 = vpop.f32.mrb[0].mxu0
  %v1442 = vadd.f32 0.0, %v1441
  %v1443 = vpop.f32.mrb[0].mxu0
  %1444 = vmatprep.mubr.f32.mxu0 0.0
  %1445 = vmatmul.mubr.f32.gmra.mrb[0].mxu0 %v1365
  %v1446 = vpop.f32.mrb[0].mxu0
  %v1447 = vadd.f32 0.0, %v1446
  %v1448 = vpop.f32.mrb[0].mxu0
  %1449 = vmatprep.mubr.f32.mxu0 0.0
  %1450 = vmatmul.mubr.f32.gmra.mrb[0].mxu0 %v1368
  %v1451 = vpop.f32.mrb[0].mxu0
  %v1452 = vadd.f32 0.0, %v1451
  %v1453 = vpop.f32.mrb[0].mxu0
  %1454 = vdwg.mxu0
  %v1455 = vld [vmem:[%s8 + $0x58] sm:$0xff]
  %1456 = vmatprep.subr.mxu0 0.0
  %1457 = vmatpush1.msra.mxu0 %v1455
  %1458 = vmatprep.subr.mxu0 0.0
  %1459 = vmatpush1.msra.mxu0 0.0
  %1460 = vmatprep.subr.mxu0 0.0
  %1461 = vmatpush1.msra.mxu0 0.0
  %1462 = vmatprep.subr.mxu0 0.0
  %1463 = vmatpush1.msra.mxu0 0.0
  %1464 = vmatprep.subr.mxu0 0.0
  %1465 = vmatpush1.msra.mxu0 0.0
  %1466 = vmatprep.subr.mxu0 0.0
  %1467 = vmatpush1.msra.mxu0 0.0
  %1468 = vmatprep.subr.mxu0 0.0
  %1469 = vmatpush1.msra.mxu0 0.0
  %1470 = vmatprep.subr.mxu0 0.0
  %1471 = vmatpush1.msra.mxu0 0.0
  %1472 = vmatprep.subr.mxu0 0.0
  %1473 = vmatpush1.msra.mxu0 0.0
  %1474 = vmatprep.subr.mxu0 0.0
  %1475 = vmatpush1.msra.mxu0 0.0
  %1476 = vmatprep.subr.mxu0 0.0
  %1477 = vmatpush1.msra.mxu0 0.0
  %1478 = vmatprep.subr.mxu0 0.0
  %1479 = vmatpush1.msra.mxu0 0.0
  %1480 = vmatprep.subr.mxu0 0.0
  %1481 = vmatpush1.msra.mxu0 0.0
  %1482 = vmatprep.subr.mxu0 0.0
  %1483 = vmatpush1.msra.mxu0 0.0
  %1484 = vmatprep.subr.mxu0 0.0
  %1485 = vmatpush1.msra.mxu0 0.0
  %1486 = vmatprep.subr.mxu0 0.0
  %1487 = vmatpush1.msra.mxu0 0.0
  %1488 = vmatprep.subr.mxu0 0.0
  %1489 = vmatpush1.msra.mxu0 0.0
  %1490 = vmatprep.subr.mxu0 0.0
  %1491 = vmatpush1.msra.mxu0 0.0
  %1492 = vmatprep.subr.mxu0 0.0
  %1493 = vmatpush1.msra.mxu0 0.0
  %1494 = vmatprep.subr.mxu0 0.0
  %1495 = vmatpush1.msra.mxu0 0.0
  %1496 = vmatprep.subr.mxu0 0.0
  %1497 = vmatpush1.msra.mxu0 0.0
  %1498 = vmatprep.subr.mxu0 0.0
  %1499 = vmatpush1.msra.mxu0 0.0
  %1500 = vmatprep.subr.mxu0 0.0
  %1501 = vmatpush1.msra.mxu0 0.0
  %1502 = vmatprep.subr.mxu0 0.0
  %1503 = vmatpush1.msra.mxu0 0.0
  %1504 = vmatprep.subr.mxu0 0.0
  %1505 = vmatpush1.msra.mxu0 0.0
  %1506 = vmatprep.subr.mxu0 0.0
  %1507 = vmatpush1.msra.mxu0 0.0
  %1508 = vmatprep.subr.mxu0 0.0
  %1509 = vmatpush1.msra.mxu0 0.0
  %1510 = vmatprep.subr.mxu0 0.0
  %1511 = vmatpush1.msra.mxu0 0.0
  %1512 = vmatprep.subr.mxu0 0.0
  %1513 = vmatpush1.msra.mxu0 0.0
  %1514 = vmatprep.subr.mxu0 0.0
  %1515 = vmatpush1.msra.mxu0 0.0
  %1516 = vmatprep.subr.mxu0 0.0
  %1517 = vmatpush1.msra.mxu0 0.0
  %1518 = vmatprep.subr.mxu0 0.0
  %1519 = vmatpush1.msra.mxu0 0.0
  %1520 = vmatprep.mubr.f32.mxu0 0.0
  %1521 = vmatmul.mubr.f32.gmra.mrb[0].mxu0 %v384
  %v1522 = vpop.f32.mrb[0].mxu0
  %v1523 = vadd.f32 0.0, %v1522
  %v1524 = vpop.f32.mrb[0].mxu0
  %1525 = vdwg.mxu0
  %v1526 = vld [vmem:[%s8 + $0x38] sm:$0xff]
  %v1527 = vld [vmem:[%s8 + $0x40] sm:$0xff]
  %v1528 = vld [vmem:[%s8 + $0x48] sm:$0xff]
  %v1529 = vld [vmem:[%s8 + $0x50] sm:$0xff]
  %v1531 = vsel %vm197, %v1437, 0
  %v1534 = vsel %vm197, %v1442, 0
  %v1537 = vsel %vm197, %v1447, 0
  %v1540 = vsel %vm197, %v1452, 0
  %1542 = vmatprep.subr.mxu0 0.0
  %1543 = vmatpush1.msra.mxu0 %v1528
  %1544 = vmatprep.subr.mxu0 0.0
  %1545 = vmatpush1.msra.mxu0 %v1529
  %1546 = vmatprep.subr.mxu0 0.0
  %1547 = vmatpush1.msra.mxu0 0.0
  %1548 = vmatprep.subr.mxu0 0.0
  %1549 = vmatpush1.msra.mxu0 0.0
  %1550 = vmatprep.subr.mxu0 0.0
  %1551 = vmatpush1.msra.mxu0 0.0
  %1552 = vmatprep.subr.mxu0 0.0
  %1553 = vmatpush1.msra.mxu0 0.0
  %1554 = vmatprep.subr.mxu0 0.0
  %1555 = vmatpush1.msra.mxu0 0.0
  %1556 = vmatprep.subr.mxu0 0.0
  %1557 = vmatpush1.msra.mxu0 0.0
  %1558 = vmatprep.subr.mxu0 0.0
  %1559 = vmatpush1.msra.mxu0 0.0
  %1560 = vmatprep.subr.mxu0 0.0
  %1561 = vmatpush1.msra.mxu0 0.0
  %1562 = vmatprep.subr.mxu0 0.0
  %1563 = vmatpush1.msra.mxu0 0.0
  %1564 = vmatprep.subr.mxu0 0.0
  %1565 = vmatpush1.msra.mxu0 0.0
  %1566 = vmatprep.subr.mxu0 0.0
  %1567 = vmatpush1.msra.mxu0 0.0
  %1568 = vmatprep.subr.mxu0 0.0
  %1569 = vmatpush1.msra.mxu0 0.0
  %1570 = vmatprep.subr.mxu0 0.0
  %1571 = vmatpush1.msra.mxu0 0.0
  %1572 = vmatprep.subr.mxu0 0.0
  %1573 = vmatpush1.msra.mxu0 0.0
  %1574 = vmatprep.subr.mxu0 0.0
  %1575 = vmatpush1.msra.mxu0 0.0
  %1576 = vmatprep.subr.mxu0 0.0
  %1577 = vmatpush1.msra.mxu0 0.0
  %1578 = vmatprep.subr.mxu0 0.0
  %1579 = vmatpush1.msra.mxu0 0.0
  %1580 = vmatprep.subr.mxu0 0.0
  %1581 = vmatpush1.msra.mxu0 0.0
  %1582 = vmatprep.subr.mxu0 0.0
  %1583 = vmatpush1.msra.mxu0 0.0
  %1584 = vmatprep.subr.mxu0 0.0
  %1585 = vmatpush1.msra.mxu0 0.0
  %1586 = vmatprep.subr.mxu0 0.0
  %1587 = vmatpush1.msra.mxu0 0.0
  %1588 = vmatprep.subr.mxu0 0.0
  %1589 = vmatpush1.msra.mxu0 0.0
  %1590 = vmatprep.subr.mxu0 0.0
  %1591 = vmatpush1.msra.mxu0 0.0
  %1592 = vmatprep.subr.mxu0 0.0
  %1593 = vmatpush1.msra.mxu0 0.0
  %1594 = vmatprep.subr.mxu0 0.0
  %1595 = vmatpush1.msra.mxu0 0.0
  %1596 = vmatprep.subr.mxu0 0.0
  %1597 = vmatpush1.msra.mxu0 0.0
  %1598 = vmatprep.subr.mxu0 0.0
  %1599 = vmatpush1.msra.mxu0 0.0
  %1600 = vmatprep.subr.mxu0 0.0
  %1601 = vmatpush1.msra.mxu0 0.0
  %1602 = vmatprep.subr.mxu0 0.0
  %1603 = vmatpush1.msra.mxu0 0.0
  %1604 = vmatprep.subr.mxu0 0.0
  %1605 = vmatpush1.msra.mxu0 0.0
  %1606 = vmatprep.mubr.f32.mxu0 0.0
  %1607 = vmatmul.mubr.f32.gmra.mrb[0].mxu0 %v1531
  %v1608 = vpop.f32.mrb[0].mxu0
  %v1609 = vadd.f32 0.0, %v1608
  %v1610 = vpop.f32.mrb[0].mxu0
  %1611 = vmatprep.mubr.f32.mxu0 0.0
  %1612 = vmatmul.mubr.f32.gmra.mrb[0].mxu0 %v1534
  %v1613 = vpop.f32.mrb[0].mxu0
  %v1614 = vadd.f32 0.0, %v1613
  %v1615 = vpop.f32.mrb[0].mxu0
  %1616 = vmatprep.mubr.f32.mxu0 0.0
  %1617 = vmatmul.mubr.f32.gmra.mrb[0].mxu0 %v1537
  %v1618 = vpop.f32.mrb[0].mxu0
  %v1619 = vadd.f32 0.0, %v1618
  %v1620 = vpop.f32.mrb[0].mxu0
  %1621 = vmatprep.mubr.f32.mxu0 0.0
  %1622 = vmatmul.mubr.f32.gmra.mrb[0].mxu0 %v1540
  %v1623 = vpop.f32.mrb[0].mxu0
  %v1624 = vadd.f32 0.0, %v1623
  %v1625 = vpop.f32.mrb[0].mxu0
  %1626 = vdwg.mxu0
  %1627 = vmatprep.subr.mxu0 0.0
  %1628 = vmatpush1.msra.mxu0 %v1526
  %1629 = vmatprep.subr.mxu0 0.0
  %1630 = vmatpush1.msra.mxu0 %v1527
  %1631 = vmatprep.subr.mxu0 0.0
  %1632 = vmatpush1.msra.mxu0 0.0
  %1633 = vmatprep.subr.mxu0 0.0
  %1634 = vmatpush1.msra.mxu0 0.0
  %1635 = vmatprep.subr.mxu0 0.0
  %1636 = vmatpush1.msra.mxu0 0.0
  %1637 = vmatprep.subr.mxu0 0.0
  %1638 = vmatpush1.msra.mxu0 0.0
  %1639 = vmatprep.subr.mxu0 0.0
  %1640 = vmatpush1.msra.mxu0 0.0
  %1641 = vmatprep.subr.mxu0 0.0
  %1642 = vmatpush1.msra.mxu0 0.0
  %1643 = vmatprep.subr.mxu0 0.0
  %1644 = vmatpush1.msra.mxu0 0.0
  %1645 = vmatprep.subr.mxu0 0.0
  %1646 = vmatpush1.msra.mxu0 0.0
  %1647 = vmatprep.subr.mxu0 0.0
  %1648 = vmatpush1.msra.mxu0 0.0
  %1649 = vmatprep.subr.mxu0 0.0
  %1650 = vmatpush1.msra.mxu0 0.0
  %1651 = vmatprep.subr.mxu0 0.0
  %1652 = vmatpush1.msra.mxu0 0.0
  %1653 = vmatprep.subr.mxu0 0.0
  %1654 = vmatpush1.msra.mxu0 0.0
  %1655 = vmatprep.subr.mxu0 0.0
  %1656 = vmatpush1.msra.mxu0 0.0
  %1657 = vmatprep.subr.mxu0 0.0
  %1658 = vmatpush1.msra.mxu0 0.0
  %1659 = vmatprep.subr.mxu0 0.0
  %1660 = vmatpush1.msra.mxu0 0.0
  %1661 = vmatprep.subr.mxu0 0.0
  %1662 = vmatpush1.msra.mxu0 0.0
  %1663 = vmatprep.subr.mxu0 0.0
  %1664 = vmatpush1.msra.mxu0 0.0
  %1665 = vmatprep.subr.mxu0 0.0
  %1666 = vmatpush1.msra.mxu0 0.0
  %1667 = vmatprep.subr.mxu0 0.0
  %1668 = vmatpush1.msra.mxu0 0.0
  %1669 = vmatprep.subr.mxu0 0.0
  %1670 = vmatpush1.msra.mxu0 0.0
  %1671 = vmatprep.subr.mxu0 0.0
  %1672 = vmatpush1.msra.mxu0 0.0
  %1673 = vmatprep.subr.mxu0 0.0
  %1674 = vmatpush1.msra.mxu0 0.0
  %1675 = vmatprep.subr.mxu0 0.0
  %1676 = vmatpush1.msra.mxu0 0.0
  %1677 = vmatprep.subr.mxu0 0.0
  %1678 = vmatpush1.msra.mxu0 0.0
  %1679 = vmatprep.subr.mxu0 0.0
  %1680 = vmatpush1.msra.mxu0 0.0
  %1681 = vmatprep.subr.mxu0 0.0
  %1682 = vmatpush1.msra.mxu0 0.0
  %1683 = vmatprep.subr.mxu0 0.0
  %1684 = vmatpush1.msra.mxu0 0.0
  %1685 = vmatprep.subr.mxu0 0.0
  %1686 = vmatpush1.msra.mxu0 0.0
  %1687 = vmatprep.subr.mxu0 0.0
  %1688 = vmatpush1.msra.mxu0 0.0
  %1689 = vmatprep.subr.mxu0 0.0
  %1690 = vmatpush1.msra.mxu0 0.0
  %1691 = vmatprep.mubr.f32.mxu0 0.0
  %1692 = vmatmul.mubr.f32.gmra.mrb[0].mxu0 %v199
  %v1693 = vpop.f32.mrb[0].mxu0
  %v1694 = vadd.f32 %v1609, %v1693
  %v1695 = vpop.f32.mrb[0].mxu0
  %1696 = vmatprep.mubr.f32.mxu0 0.0
  %1697 = vmatmul.mubr.f32.gmra.mrb[0].mxu0 %v202
  %v1698 = vpop.f32.mrb[0].mxu0
  %v1699 = vadd.f32 %v1614, %v1698
  %v1700 = vpop.f32.mrb[0].mxu0
  %1701 = vmatprep.mubr.f32.mxu0 0.0
  %1702 = vmatmul.mubr.f32.gmra.mrb[0].mxu0 %v205
  %v1703 = vpop.f32.mrb[0].mxu0
  %v1704 = vadd.f32 %v1619, %v1703
  %v1705 = vpop.f32.mrb[0].mxu0
  %1706 = vmatprep.mubr.f32.mxu0 0.0
  %1707 = vmatmul.mubr.f32.gmra.mrb[0].mxu0 %v208
  %v1708 = vpop.f32.mrb[0].mxu0
  %v1709 = vadd.f32 %v1624, %v1708
  %v1710 = vpop.f32.mrb[0].mxu0
  %1711 = vdwg.mxu0
  %v1713 = vsel %vm99, %v92, 0
  %v1716 = vsel %vm99, %v93, 0
  %v1719 = vsel %vm99, %v94, 0
  %v1722 = vsel %vm99, %v95, 0
  %1724 = vmatprep.subr.mxu0 0.0
  %1725 = vmatpush1.msra.mxu0 %v1523
  %1726 = vmatprep.subr.mxu0 0.0
  %1727 = vmatpush1.msra.mxu0 0.0
  %1728 = vmatprep.subr.mxu0 0.0
  %1729 = vmatpush1.msra.mxu0 0.0
  %1730 = vmatprep.subr.mxu0 0.0
  %1731 = vmatpush1.msra.mxu0 0.0
  %1732 = vmatprep.subr.mxu0 0.0
  %1733 = vmatpush1.msra.mxu0 0.0
  %1734 = vmatprep.subr.mxu0 0.0
  %1735 = vmatpush1.msra.mxu0 0.0
  %1736 = vmatprep.subr.mxu0 0.0
  %1737 = vmatpush1.msra.mxu0 0.0
  %1738 = vmatprep.subr.mxu0 0.0
  %1739 = vmatpush1.msra.mxu0 0.0
  %1740 = vmatprep.subr.mxu0 0.0
  %1741 = vmatpush1.msra.mxu0 0.0
  %1742 = vmatprep.subr.mxu0 0.0
  %1743 = vmatpush1.msra.mxu0 0.0
  %1744 = vmatprep.subr.mxu0 0.0
  %1745 = vmatpush1.msra.mxu0 0.0
  %1746 = vmatprep.subr.mxu0 0.0
  %1747 = vmatpush1.msra.mxu0 0.0
  %1748 = vmatprep.subr.mxu0 0.0
  %1749 = vmatpush1.msra.mxu0 0.0
  %1750 = vmatprep.subr.mxu0 0.0
  %1751 = vmatpush1.msra.mxu0 0.0
  %1752 = vmatprep.subr.mxu0 0.0
  %1753 = vmatpush1.msra.mxu0 0.0
  %1754 = vmatprep.subr.mxu0 0.0
  %1755 = vmatpush1.msra.mxu0 0.0
  %1756 = vmatprep.subr.mxu0 0.0
  %1757 = vmatpush1.msra.mxu0 0.0
  %1758 = vmatprep.subr.mxu0 0.0
  %1759 = vmatpush1.msra.mxu0 0.0
  %1760 = vmatprep.subr.mxu0 0.0
  %1761 = vmatpush1.msra.mxu0 0.0
  %1762 = vmatprep.subr.mxu0 0.0
  %1763 = vmatpush1.msra.mxu0 0.0
  %1764 = vmatprep.subr.mxu0 0.0
  %1765 = vmatpush1.msra.mxu0 0.0
  %1766 = vmatprep.subr.mxu0 0.0
  %1767 = vmatpush1.msra.mxu0 0.0
  %1768 = vmatprep.subr.mxu0 0.0
  %1769 = vmatpush1.msra.mxu0 0.0
  %1770 = vmatprep.subr.mxu0 0.0
  %1771 = vmatpush1.msra.mxu0 0.0
  %1772 = vmatprep.subr.mxu0 0.0
  %1773 = vmatpush1.msra.mxu0 0.0
  %1774 = vmatprep.subr.mxu0 0.0
  %1775 = vmatpush1.msra.mxu0 0.0
  %1776 = vmatprep.subr.mxu0 0.0
  %1777 = vmatpush1.msra.mxu0 0.0
  %1778 = vmatprep.subr.mxu0 0.0
  %1779 = vmatpush1.msra.mxu0 0.0
  %1780 = vmatprep.subr.mxu0 0.0
  %1781 = vmatpush1.msra.mxu0 0.0
  %1782 = vmatprep.subr.mxu0 0.0
  %1783 = vmatpush1.msra.mxu0 0.0
  %1784 = vmatprep.subr.mxu0 0.0
  %1785 = vmatpush1.msra.mxu0 0.0
  %1786 = vmatprep.subr.mxu0 0.0
  %1787 = vmatpush1.msra.mxu0 0.0
  %1788 = vmatprep.mubr.f32.mxu0 0.0
  %1789 = vmatmul.mubr.f32.gmra.mrb[0].mxu0 %v1713
  %v1790 = vpop.f32.mrb[0].mxu0
  %v1791 = vadd.f32 0.0, %v1790
  %v1792 = vpop.f32.mrb[0].mxu0
  %1793 = vmatprep.mubr.f32.mxu0 0.0
  %1794 = vmatmul.mubr.f32.gmra.mrb[0].mxu0 %v1716
  %v1795 = vpop.f32.mrb[0].mxu0
  %v1796 = vadd.f32 0.0, %v1795
  %v1797 = vpop.f32.mrb[0].mxu0
  %1798 = vmatprep.mubr.f32.mxu0 0.0
  %1799 = vmatmul.mubr.f32.gmra.mrb[0].mxu0 %v1719
  %v1800 = vpop.f32.mrb[0].mxu0
  %v1801 = vadd.f32 0.0, %v1800
  %v1802 = vpop.f32.mrb[0].mxu0
  %1803 = vmatprep.mubr.f32.mxu0 0.0
  %1804 = vmatmul.mubr.f32.gmra.mrb[0].mxu0 %v1722
  %v1805 = vpop.f32.mrb[0].mxu0
  %v1806 = vadd.f32 0.0, %v1805
  %v1807 = vpop.f32.mrb[0].mxu0
  %1808 = vdwg.mxu0
  %v1809 = vadd.f32 %v1694, %v1791
  %v1810 = vadd.f32 %v1699, %v1796
  %v1811 = vadd.f32 %v1704, %v1801
  %v1812 = vadd.f32 %v1709, %v1806
  %v1813 = vld [vmem:[%s8 + $0x90] sm:$0x1]
  %v1814 = vlaneseq
  %v1815 = vshrl.u32 %v1814, 7
  %v1816 = vsub.s32 0, %v1815
  %v1817 = vrot.slane %v1813, %v1816
  %v1818 = vadd.f32 %v1809, %v1817
  %v1819 = vadd.f32 %v1810, %v1817
  %v1820 = vadd.f32 %v1811, %v1817
  %v1821 = vadd.f32 %v1812, %v1817
  %v1822 = vmax.f32 %v1818, 0.0
  %v1823 = vmax.f32 %v1819, 0.0
  %v1824 = vmax.f32 %v1820, 0.0
  %v1825 = vmax.f32 %v1821, 0.0
  %v1826 = vld [vmem:[%s9 + $0x20] sm:$0xff]
  %v1827 = vld [vmem:[%s9 + $0x28] sm:$0xff]
  %v1828 = vld [vmem:[%s9 + $0x30] sm:$0xff]
  %v1829 = vld [vmem:[%s9 + $0x38] sm:$0xff]
  %v1830 = vld [vmem:[%s9 + $0x68] sm:$0x1]
  %v1831 = vlaneseq
  %v1832 = vshrl.u32 %v1831, 7
  %v1833 = vsub.s32 0, %v1832
  %v1834 = vrot.slane %v1830, %v1833
  %v1836 = vsel %vm457, %v1822, 0
  %v1839 = vsel %vm457, %v1823, 0
  %v1842 = vsel %vm457, %v1824, 0
  %v1845 = vsel %vm457, %v1825, 0
  %1847 = vmatprep.subr.mxu0 0.0
  %1848 = vmatpush1.msra.mxu0 %v1826
  %1849 = vmatprep.subr.mxu0 0.0
  %1850 = vmatpush1.msra.mxu0 %v1827
  %1851 = vmatprep.subr.mxu0 0.0
  %1852 = vmatpush1.msra.mxu0 %v1828
  %1853 = vmatprep.subr.mxu0 0.0
  %1854 = vmatpush1.msra.mxu0 %v1829
  %1855 = vmatprep.subr.mxu0 0.0
  %1856 = vmatpush1.msra.mxu0 0.0
  %1857 = vmatprep.subr.mxu0 0.0
  %1858 = vmatpush1.msra.mxu0 0.0
  %1859 = vmatprep.subr.mxu0 0.0
  %1860 = vmatpush1.msra.mxu0 0.0
  %1861 = vmatprep.subr.mxu0 0.0
  %1862 = vmatpush1.msra.mxu0 0.0
  %1863 = vmatprep.subr.mxu0 0.0
  %1864 = vmatpush1.msra.mxu0 0.0
  %1865 = vmatprep.subr.mxu0 0.0
  %1866 = vmatpush1.msra.mxu0 0.0
  %1867 = vmatprep.subr.mxu0 0.0
  %1868 = vmatpush1.msra.mxu0 0.0
  %1869 = vmatprep.subr.mxu0 0.0
  %1870 = vmatpush1.msra.mxu0 0.0
  %1871 = vmatprep.subr.mxu0 0.0
  %1872 = vmatpush1.msra.mxu0 0.0
  %1873 = vmatprep.subr.mxu0 0.0
  %1874 = vmatpush1.msra.mxu0 0.0
  %1875 = vmatprep.subr.mxu0 0.0
  %1876 = vmatpush1.msra.mxu0 0.0
  %1877 = vmatprep.subr.mxu0 0.0
  %1878 = vmatpush1.msra.mxu0 0.0
  %1879 = vmatprep.subr.mxu0 0.0
  %1880 = vmatpush1.msra.mxu0 0.0
  %1881 = vmatprep.subr.mxu0 0.0
  %1882 = vmatpush1.msra.mxu0 0.0
  %1883 = vmatprep.subr.mxu0 0.0
  %1884 = vmatpush1.msra.mxu0 0.0
  %1885 = vmatprep.subr.mxu0 0.0
  %1886 = vmatpush1.msra.mxu0 0.0
  %1887 = vmatprep.subr.mxu0 0.0
  %1888 = vmatpush1.msra.mxu0 0.0
  %1889 = vmatprep.subr.mxu0 0.0
  %1890 = vmatpush1.msra.mxu0 0.0
  %1891 = vmatprep.subr.mxu0 0.0
  %1892 = vmatpush1.msra.mxu0 0.0
  %1893 = vmatprep.subr.mxu0 0.0
  %1894 = vmatpush1.msra.mxu0 0.0
  %1895 = vmatprep.subr.mxu0 0.0
  %1896 = vmatpush1.msra.mxu0 0.0
  %1897 = vmatprep.subr.mxu0 0.0
  %1898 = vmatpush1.msra.mxu0 0.0
  %1899 = vmatprep.subr.mxu0 0.0
  %1900 = vmatpush1.msra.mxu0 0.0
  %1901 = vmatprep.subr.mxu0 0.0
  %1902 = vmatpush1.msra.mxu0 0.0
  %1903 = vmatprep.subr.mxu0 0.0
  %1904 = vmatpush1.msra.mxu0 0.0
  %1905 = vmatprep.subr.mxu0 0.0
  %1906 = vmatpush1.msra.mxu0 0.0
  %1907 = vmatprep.subr.mxu0 0.0
  %1908 = vmatpush1.msra.mxu0 0.0
  %1909 = vmatprep.subr.mxu0 0.0
  %1910 = vmatpush1.msra.mxu0 0.0
  %1911 = vmatprep.mubr.f32.mxu0 0.0
  %1912 = vmatmul.mubr.f32.gmra.mrb[0].mxu0 %v1836
  %v1913 = vpop.f32.mrb[0].mxu0
  %v1914 = vadd.f32 %v1834, %v1913
  %v1915 = vpop.f32.mrb[0].mxu0
  %1916 = vmatprep.mubr.f32.mxu0 0.0
  %1917 = vmatmul.mubr.f32.gmra.mrb[0].mxu0 %v1839
  %v1918 = vpop.f32.mrb[0].mxu0
  %v1919 = vadd.f32 %v1834, %v1918
  %v1920 = vpop.f32.mrb[0].mxu0
  %1921 = vmatprep.mubr.f32.mxu0 0.0
  %1922 = vmatmul.mubr.f32.gmra.mrb[0].mxu0 %v1842
  %v1923 = vpop.f32.mrb[0].mxu0
  %v1924 = vadd.f32 %v1834, %v1923
  %v1925 = vpop.f32.mrb[0].mxu0
  %1926 = vmatprep.mubr.f32.mxu0 0.0
  %1927 = vmatmul.mubr.f32.gmra.mrb[0].mxu0 %v1845
  %v1928 = vpop.f32.mrb[0].mxu0
  %v1929 = vadd.f32 %v1834, %v1928
  %v1930 = vpop.f32.mrb[0].mxu0
  %1931 = vdwg.mxu0
  %1932 = vxpose.xlu0.b32.start [1/16] %v80, 128
  %1933 = vxpose.xlu0.b32.cont [2/16] %v81, 128
  %1934 = vxpose.xlu0.b32.cont [3/16] %v82, 128
  %1935 = vxpose.xlu0.b32.cont [4/16] %v83, 128
  %1936 = vxpose.xlu0.b32.cont [5/16] %v84, 128
  %1937 = vxpose.xlu0.b32.cont [6/16] %v85, 128
  %1938 = vxpose.xlu0.b32.cont [7/16] %v86, 128
  %1939 = vxpose.xlu0.b32.cont [8/16] %v87, 128
  %1940 = vxpose.xlu0.b32.cont [9/16] %v88, 128
  %1941 = vxpose.xlu0.b32.cont [10/16] %v89, 128
  %1942 = vxpose.xlu0.b32.cont [11/16] %v90, 128
  %1943 = vxpose.xlu0.b32.cont [12/16] %v91, 128
  %1944 = vxpose.xlu0.b32.cont [13/16] 0.0, 128
  %1945 = vxpose.xlu0.b32.cont [14/16] 0.0, 128
  %1946 = vxpose.xlu0.b32.cont [15/16] 0.0, 128
  %1947 = vxpose.xlu0.b32.end [16/16] 0.0, 128
  %v1948 = vpop.trf.xlu0
  %v1949 = vpop.trf.xlu0
  %v1950 = vpop.trf.xlu0
  %v1951 = vpop.trf.xlu0
  %v1952 = vpop.trf.xlu0
  %v1953 = vpop.trf.xlu0
  %v1954 = vpop.trf.xlu0
  %v1955 = vpop.trf.xlu0
  %v1956 = vpop.trf.xlu0
  %v1957 = vpop.trf.xlu0
  %v1958 = vpop.trf.xlu0
  %v1959 = vpop.trf.xlu0
  %v1960 = vpop.trf.xlu0
  %v1961 = vpop.trf.xlu0
  %v1962 = vpop.trf.xlu0
  %v1963 = vpop.trf.xlu0
  %v1965 = vsel %vm1357, %v1948, 0
  %1967 = vmatprep.subr.mxu0 0.0
  %1968 = vmatpush1.msra.mxu0 %v1267
  %1969 = vmatprep.subr.mxu0 0.0
  %1970 = vmatpush1.msra.mxu0 %v1272
  %1971 = vmatprep.subr.mxu0 0.0
  %1972 = vmatpush1.msra.mxu0 %v1277
  %1973 = vmatprep.subr.mxu0 0.0
  %1974 = vmatpush1.msra.mxu0 %v1282
  %1975 = vmatprep.subr.mxu0 0.0
  %1976 = vmatpush1.msra.mxu0 %v1287
  %1977 = vmatprep.subr.mxu0 0.0
  %1978 = vmatpush1.msra.mxu0 %v1292
  %1979 = vmatprep.subr.mxu0 0.0
  %1980 = vmatpush1.msra.mxu0 %v1297
  %1981 = vmatprep.subr.mxu0 0.0
  %1982 = vmatpush1.msra.mxu0 %v1302
  %1983 = vmatprep.subr.mxu0 0.0
  %1984 = vmatpush1.msra.mxu0 %v1307
  %1985 = vmatprep.subr.mxu0 0.0
  %1986 = vmatpush1.msra.mxu0 %v1312
  %1987 = vmatprep.subr.mxu0 0.0
  %1988 = vmatpush1.msra.mxu0 %v1317
  %1989 = vmatprep.subr.mxu0 0.0
  %1990 = vmatpush1.msra.mxu0 %v1322
  %1991 = vmatprep.subr.mxu0 0.0
  %1992 = vmatpush1.msra.mxu0 0.0
  %1993 = vmatprep.subr.mxu0 0.0
  %1994 = vmatpush1.msra.mxu0 0.0
  %1995 = vmatprep.subr.mxu0 0.0
  %1996 = vmatpush1.msra.mxu0 0.0
  %1997 = vmatprep.subr.mxu0 0.0
  %1998 = vmatpush1.msra.mxu0 0.0
  %1999 = vmatprep.subr.mxu0 0.0
  %2000 = vmatpush1.msra.mxu0 0.0
  %2001 = vmatprep.subr.mxu0 0.0
  %2002 = vmatpush1.msra.mxu0 0.0
  %2003 = vmatprep.subr.mxu0 0.0
  %2004 = vmatpush1.msra.mxu0 0.0
  %2005 = vmatprep.subr.mxu0 0.0
  %2006 = vmatpush1.msra.mxu0 0.0
  %2007 = vmatprep.subr.mxu0 0.0
  %2008 = vmatpush1.msra.mxu0 0.0
  %2009 = vmatprep.subr.mxu0 0.0
  %2010 = vmatpush1.msra.mxu0 0.0
  %2011 = vmatprep.subr.mxu0 0.0
  %2012 = vmatpush1.msra.mxu0 0.0
  %2013 = vmatprep.subr.mxu0 0.0
  %2014 = vmatpush1.msra.mxu0 0.0
  %2015 = vmatprep.subr.mxu0 0.0
  %2016 = vmatpush1.msra.mxu0 0.0
  %2017 = vmatprep.subr.mxu0 0.0
  %2018 = vmatpush1.msra.mxu0 0.0
  %2019 = vmatprep.subr.mxu0 0.0
  %2020 = vmatpush1.msra.mxu0 0.0
  %2021 = vmatprep.subr.mxu0 0.0
  %2022 = vmatpush1.msra.mxu0 0.0
  %2023 = vmatprep.subr.mxu0 0.0
  %2024 = vmatpush1.msra.mxu0 0.0
  %2025 = vmatprep.subr.mxu0 0.0
  %2026 = vmatpush1.msra.mxu0 0.0
  %2027 = vmatprep.subr.mxu0 0.0
  %2028 = vmatpush1.msra.mxu0 0.0
  %2029 = vmatprep.subr.mxu0 0.0
  %2030 = vmatpush1.msra.mxu0 0.0
  %2031 = vmatprep.mubr.f32.mxu0 0.0
  %2032 = vmatmul.mubr.f32.gmra.mrb[0].mxu0 %v1965
  %v2033 = vpop.f32.mrb[0].mxu0
  %v2034 = vadd.f32 0.0, %v2033
  %v2035 = vpop.f32.mrb[0].mxu0
  %2036 = vdwg.mxu0
  %2037 = vxpose.xlu0.b32.start [1/16] %v92, 128
  %2038 = vxpose.xlu0.b32.cont [2/16] %v93, 128
  %2039 = vxpose.xlu0.b32.cont [3/16] %v94, 128
  %2040 = vxpose.xlu0.b32.cont [4/16] %v95, 128
  %2041 = vxpose.xlu0.b32.cont [5/16] 0.0, 128
  %2042 = vxpose.xlu0.b32.cont [6/16] 0.0, 128
  %2043 = vxpose.xlu0.b32.cont [7/16] 0.0, 128
  %2044 = vxpose.xlu0.b32.cont [8/16] 0.0, 128
  %2045 = vxpose.xlu0.b32.cont [9/16] 0.0, 128
  %2046 = vxpose.xlu0.b32.cont [10/16] 0.0, 128
  %2047 = vxpose.xlu0.b32.cont [11/16] 0.0, 128
  %2048 = vxpose.xlu0.b32.cont [12/16] 0.0, 128
  %2049 = vxpose.xlu0.b32.cont [13/16] 0.0, 128
  %2050 = vxpose.xlu0.b32.cont [14/16] 0.0, 128
  %2051 = vxpose.xlu0.b32.cont [15/16] 0.0, 128
  %2052 = vxpose.xlu0.b32.end [16/16] 0.0, 128
  %v2053 = vpop.trf.xlu0
  %v2054 = vpop.trf.xlu0
  %v2055 = vpop.trf.xlu0
  %v2056 = vpop.trf.xlu0
  %v2057 = vpop.trf.xlu0
  %v2058 = vpop.trf.xlu0
  %v2059 = vpop.trf.xlu0
  %v2060 = vpop.trf.xlu0
  %v2061 = vpop.trf.xlu0
  %v2062 = vpop.trf.xlu0
  %v2063 = vpop.trf.xlu0
  %v2064 = vpop.trf.xlu0
  %v2065 = vpop.trf.xlu0
  %v2066 = vpop.trf.xlu0
  %v2067 = vpop.trf.xlu0
  %v2068 = vpop.trf.xlu0
  %v2070 = vsel %vm457, %v2053, 0
  %2072 = vmatprep.subr.mxu0 0.0
  %2073 = vmatpush1.msra.mxu0 %v1914
  %2074 = vmatprep.subr.mxu0 0.0
  %2075 = vmatpush1.msra.mxu0 %v1919
  %2076 = vmatprep.subr.mxu0 0.0
  %2077 = vmatpush1.msra.mxu0 %v1924
  %2078 = vmatprep.subr.mxu0 0.0
  %2079 = vmatpush1.msra.mxu0 %v1929
  %2080 = vmatprep.subr.mxu0 0.0
  %2081 = vmatpush1.msra.mxu0 0.0
  %2082 = vmatprep.subr.mxu0 0.0
  %2083 = vmatpush1.msra.mxu0 0.0
  %2084 = vmatprep.subr.mxu0 0.0
  %2085 = vmatpush1.msra.mxu0 0.0
  %2086 = vmatprep.subr.mxu0 0.0
  %2087 = vmatpush1.msra.mxu0 0.0
  %2088 = vmatprep.subr.mxu0 0.0
  %2089 = vmatpush1.msra.mxu0 0.0
  %2090 = vmatprep.subr.mxu0 0.0
  %2091 = vmatpush1.msra.mxu0 0.0
  %2092 = vmatprep.subr.mxu0 0.0
  %2093 = vmatpush1.msra.mxu0 0.0
  %2094 = vmatprep.subr.mxu0 0.0
  %2095 = vmatpush1.msra.mxu0 0.0
  %2096 = vmatprep.subr.mxu0 0.0
  %2097 = vmatpush1.msra.mxu0 0.0
  %2098 = vmatprep.subr.mxu0 0.0
  %2099 = vmatpush1.msra.mxu0 0.0
  %2100 = vmatprep.subr.mxu0 0.0
  %2101 = vmatpush1.msra.mxu0 0.0
  %2102 = vmatprep.subr.mxu0 0.0
  %2103 = vmatpush1.msra.mxu0 0.0
  %2104 = vmatprep.subr.mxu0 0.0
  %2105 = vmatpush1.msra.mxu0 0.0
  %2106 = vmatprep.subr.mxu0 0.0
  %2107 = vmatpush1.msra.mxu0 0.0
  %2108 = vmatprep.subr.mxu0 0.0
  %2109 = vmatpush1.msra.mxu0 0.0
  %2110 = vmatprep.subr.mxu0 0.0
  %2111 = vmatpush1.msra.mxu0 0.0
  %2112 = vmatprep.subr.mxu0 0.0
  %2113 = vmatpush1.msra.mxu0 0.0
  %2114 = vmatprep.subr.mxu0 0.0
  %2115 = vmatpush1.msra.mxu0 0.0
  %2116 = vmatprep.subr.mxu0 0.0
  %2117 = vmatpush1.msra.mxu0 0.0
  %2118 = vmatprep.subr.mxu0 0.0
  %2119 = vmatpush1.msra.mxu0 0.0
  %2120 = vmatprep.subr.mxu0 0.0
  %2121 = vmatpush1.msra.mxu0 0.0
  %2122 = vmatprep.subr.mxu0 0.0
  %2123 = vmatpush1.msra.mxu0 0.0
  %2124 = vmatprep.subr.mxu0 0.0
  %2125 = vmatpush1.msra.mxu0 0.0
  %2126 = vmatprep.subr.mxu0 0.0
  %2127 = vmatpush1.msra.mxu0 0.0
  %2128 = vmatprep.subr.mxu0 0.0
  %2129 = vmatpush1.msra.mxu0 0.0
  %2130 = vmatprep.subr.mxu0 0.0
  %2131 = vmatpush1.msra.mxu0 0.0
  %2132 = vmatprep.subr.mxu0 0.0
  %2133 = vmatpush1.msra.mxu0 0.0
  %2134 = vmatprep.subr.mxu0 0.0
  %2135 = vmatpush1.msra.mxu0 0.0
  %2136 = vmatprep.mubr.f32.mxu0 0.0
  %2137 = vmatmul.mubr.f32.gmra.mrb[0].mxu0 %v2070
  %v2138 = vpop.f32.mrb[0].mxu0
  %v2139 = vadd.f32 0.0, %v2138
  %v2140 = vpop.f32.mrb[0].mxu0
  %2141 = vdwg.mxu0
  %v2142 = vld [vmem:[%s8 + $0x60] sm:$0xff]
  %v2143 = vld [vmem:[%s8 + $0x68] sm:$0xff]
  %v2144 = vld [vmem:[%s8 + $0x70] sm:$0xff]
  %v2145 = vld [vmem:[%s8 + $0x78] sm:$0xff]
  %v2147 = vsel %vm197, %v2034, 0
  %2149 = vmatprep.subr.mxu0 0.0
  %2150 = vmatpush1.msra.mxu0 %v2144
  %2151 = vmatprep.subr.mxu0 0.0
  %2152 = vmatpush1.msra.mxu0 %v2145
  %2153 = vmatprep.subr.mxu0 0.0
  %2154 = vmatpush1.msra.mxu0 0.0
  %2155 = vmatprep.subr.mxu0 0.0
  %2156 = vmatpush1.msra.mxu0 0.0
  %2157 = vmatprep.subr.mxu0 0.0
  %2158 = vmatpush1.msra.mxu0 0.0
  %2159 = vmatprep.subr.mxu0 0.0
  %2160 = vmatpush1.msra.mxu0 0.0
  %2161 = vmatprep.subr.mxu0 0.0
  %2162 = vmatpush1.msra.mxu0 0.0
  %2163 = vmatprep.subr.mxu0 0.0
  %2164 = vmatpush1.msra.mxu0 0.0
  %2165 = vmatprep.subr.mxu0 0.0
  %2166 = vmatpush1.msra.mxu0 0.0
  %2167 = vmatprep.subr.mxu0 0.0
  %2168 = vmatpush1.msra.mxu0 0.0
  %2169 = vmatprep.subr.mxu0 0.0
  %2170 = vmatpush1.msra.mxu0 0.0
  %2171 = vmatprep.subr.mxu0 0.0
  %2172 = vmatpush1.msra.mxu0 0.0
  %2173 = vmatprep.subr.mxu0 0.0
  %2174 = vmatpush1.msra.mxu0 0.0
  %2175 = vmatprep.subr.mxu0 0.0
  %2176 = vmatpush1.msra.mxu0 0.0
  %2177 = vmatprep.subr.mxu0 0.0
  %2178 = vmatpush1.msra.mxu0 0.0
  %2179 = vmatprep.subr.mxu0 0.0
  %2180 = vmatpush1.msra.mxu0 0.0
  %2181 = vmatprep.subr.mxu0 0.0
  %2182 = vmatpush1.msra.mxu0 0.0
  %2183 = vmatprep.subr.mxu0 0.0
  %2184 = vmatpush1.msra.mxu0 0.0
  %2185 = vmatprep.subr.mxu0 0.0
  %2186 = vmatpush1.msra.mxu0 0.0
  %2187 = vmatprep.subr.mxu0 0.0
  %2188 = vmatpush1.msra.mxu0 0.0
  %2189 = vmatprep.subr.mxu0 0.0
  %2190 = vmatpush1.msra.mxu0 0.0
  %2191 = vmatprep.subr.mxu0 0.0
  %2192 = vmatpush1.msra.mxu0 0.0
  %2193 = vmatprep.subr.mxu0 0.0
  %2194 = vmatpush1.msra.mxu0 0.0
  %2195 = vmatprep.subr.mxu0 0.0
  %2196 = vmatpush1.msra.mxu0 0.0
  %2197 = vmatprep.subr.mxu0 0.0
  %2198 = vmatpush1.msra.mxu0 0.0
  %2199 = vmatprep.subr.mxu0 0.0
  %2200 = vmatpush1.msra.mxu0 0.0
  %2201 = vmatprep.subr.mxu0 0.0
  %2202 = vmatpush1.msra.mxu0 0.0
  %2203 = vmatprep.subr.mxu0 0.0
  %2204 = vmatpush1.msra.mxu0 0.0
  %2205 = vmatprep.subr.mxu0 0.0
  %2206 = vmatpush1.msra.mxu0 0.0
  %2207 = vmatprep.subr.mxu0 0.0
  %2208 = vmatpush1.msra.mxu0 0.0
  %2209 = vmatprep.subr.mxu0 0.0
  %2210 = vmatpush1.msra.mxu0 0.0
  %2211 = vmatprep.subr.mxu0 0.0
  %2212 = vmatpush1.msra.mxu0 0.0
  %2213 = vmatprep.mubr.f32.mxu0 0.0
  %2214 = vmatmul.mubr.f32.gmra.mrb[0].mxu0 %v2147
  %v2215 = vpop.f32.mrb[0].mxu0
  %v2216 = vadd.f32 0.0, %v2215
  %v2217 = vpop.f32.mrb[0].mxu0
  %2218 = vdwg.mxu0
  %v2220 = vsel %vm197, %v2139, 0
  %2222 = vmatprep.subr.mxu0 0.0
  %2223 = vmatpush1.msra.mxu0 %v2142
  %2224 = vmatprep.subr.mxu0 0.0
  %2225 = vmatpush1.msra.mxu0 %v2143
  %2226 = vmatprep.subr.mxu0 0.0
  %2227 = vmatpush1.msra.mxu0 0.0
  %2228 = vmatprep.subr.mxu0 0.0
  %2229 = vmatpush1.msra.mxu0 0.0
  %2230 = vmatprep.subr.mxu0 0.0
  %2231 = vmatpush1.msra.mxu0 0.0
  %2232 = vmatprep.subr.mxu0 0.0
  %2233 = vmatpush1.msra.mxu0 0.0
  %2234 = vmatprep.subr.mxu0 0.0
  %2235 = vmatpush1.msra.mxu0 0.0
  %2236 = vmatprep.subr.mxu0 0.0
  %2237 = vmatpush1.msra.mxu0 0.0
  %2238 = vmatprep.subr.mxu0 0.0
  %2239 = vmatpush1.msra.mxu0 0.0
  %2240 = vmatprep.subr.mxu0 0.0
  %2241 = vmatpush1.msra.mxu0 0.0
  %2242 = vmatprep.subr.mxu0 0.0
  %2243 = vmatpush1.msra.mxu0 0.0
  %2244 = vmatprep.subr.mxu0 0.0
  %2245 = vmatpush1.msra.mxu0 0.0
  %2246 = vmatprep.subr.mxu0 0.0
  %2247 = vmatpush1.msra.mxu0 0.0
  %2248 = vmatprep.subr.mxu0 0.0
  %2249 = vmatpush1.msra.mxu0 0.0
  %2250 = vmatprep.subr.mxu0 0.0
  %2251 = vmatpush1.msra.mxu0 0.0
  %2252 = vmatprep.subr.mxu0 0.0
  %2253 = vmatpush1.msra.mxu0 0.0
  %2254 = vmatprep.subr.mxu0 0.0
  %2255 = vmatpush1.msra.mxu0 0.0
  %2256 = vmatprep.subr.mxu0 0.0
  %2257 = vmatpush1.msra.mxu0 0.0
  %2258 = vmatprep.subr.mxu0 0.0
  %2259 = vmatpush1.msra.mxu0 0.0
  %2260 = vmatprep.subr.mxu0 0.0
  %2261 = vmatpush1.msra.mxu0 0.0
  %2262 = vmatprep.subr.mxu0 0.0
  %2263 = vmatpush1.msra.mxu0 0.0
  %2264 = vmatprep.subr.mxu0 0.0
  %2265 = vmatpush1.msra.mxu0 0.0
  %2266 = vmatprep.subr.mxu0 0.0
  %2267 = vmatpush1.msra.mxu0 0.0
  %2268 = vmatprep.subr.mxu0 0.0
  %2269 = vmatpush1.msra.mxu0 0.0
  %2270 = vmatprep.subr.mxu0 0.0
  %2271 = vmatpush1.msra.mxu0 0.0
  %2272 = vmatprep.subr.mxu0 0.0
  %2273 = vmatpush1.msra.mxu0 0.0
  %2274 = vmatprep.subr.mxu0 0.0
  %2275 = vmatpush1.msra.mxu0 0.0
  %2276 = vmatprep.subr.mxu0 0.0
  %2277 = vmatpush1.msra.mxu0 0.0
  %2278 = vmatprep.subr.mxu0 0.0
  %2279 = vmatpush1.msra.mxu0 0.0
  %2280 = vmatprep.subr.mxu0 0.0
  %2281 = vmatpush1.msra.mxu0 0.0
  %2282 = vmatprep.subr.mxu0 0.0
  %2283 = vmatpush1.msra.mxu0 0.0
  %2284 = vmatprep.subr.mxu0 0.0
  %2285 = vmatpush1.msra.mxu0 0.0
  %2286 = vmatprep.mubr.f32.mxu0 0.0
  %2287 = vmatmul.mubr.f32.gmra.mrb[0].mxu0 %v2220
  %v2288 = vpop.f32.mrb[0].mxu0
  %v2289 = vadd.f32 %v2216, %v2288
  %v2290 = vpop.f32.mrb[0].mxu0
  %2291 = vdwg.mxu0
  %v2292 = vld [vmem:[%s8 + $0x80] sm:$0xff]
  %2293 = vmatprep.subr.mxu0 0.0
  %2294 = vmatpush1.msra.mxu0 %v2292
  %2295 = vmatprep.subr.mxu0 0.0
  %2296 = vmatpush1.msra.mxu0 0.0
  %2297 = vmatprep.subr.mxu0 0.0
  %2298 = vmatpush1.msra.mxu0 0.0
  %2299 = vmatprep.subr.mxu0 0.0
  %2300 = vmatpush1.msra.mxu0 0.0
  %2301 = vmatprep.subr.mxu0 0.0
  %2302 = vmatpush1.msra.mxu0 0.0
  %2303 = vmatprep.subr.mxu0 0.0
  %2304 = vmatpush1.msra.mxu0 0.0
  %2305 = vmatprep.subr.mxu0 0.0
  %2306 = vmatpush1.msra.mxu0 0.0
  %2307 = vmatprep.subr.mxu0 0.0
  %2308 = vmatpush1.msra.mxu0 0.0
  %2309 = vmatprep.subr.mxu0 0.0
  %2310 = vmatpush1.msra.mxu0 0.0
  %2311 = vmatprep.subr.mxu0 0.0
  %2312 = vmatpush1.msra.mxu0 0.0
  %2313 = vmatprep.subr.mxu0 0.0
  %2314 = vmatpush1.msra.mxu0 0.0
  %2315 = vmatprep.subr.mxu0 0.0
  %2316 = vmatpush1.msra.mxu0 0.0
  %2317 = vmatprep.subr.mxu0 0.0
  %2318 = vmatpush1.msra.mxu0 0.0
  %2319 = vmatprep.subr.mxu0 0.0
  %2320 = vmatpush1.msra.mxu0 0.0
  %2321 = vmatprep.subr.mxu0 0.0
  %2322 = vmatpush1.msra.mxu0 0.0
  %2323 = vmatprep.subr.mxu0 0.0
  %2324 = vmatpush1.msra.mxu0 0.0
  %2325 = vmatprep.subr.mxu0 0.0
  %2326 = vmatpush1.msra.mxu0 0.0
  %2327 = vmatprep.subr.mxu0 0.0
  %2328 = vmatpush1.msra.mxu0 0.0
  %2329 = vmatprep.subr.mxu0 0.0
  %2330 = vmatpush1.msra.mxu0 0.0
  %2331 = vmatprep.subr.mxu0 0.0
  %2332 = vmatpush1.msra.mxu0 0.0
  %2333 = vmatprep.subr.mxu0 0.0
  %2334 = vmatpush1.msra.mxu0 0.0
  %2335 = vmatprep.subr.mxu0 0.0
  %2336 = vmatpush1.msra.mxu0 0.0
  %2337 = vmatprep.subr.mxu0 0.0
  %2338 = vmatpush1.msra.mxu0 0.0
  %2339 = vmatprep.subr.mxu0 0.0
  %2340 = vmatpush1.msra.mxu0 0.0
  %2341 = vmatprep.subr.mxu0 0.0
  %2342 = vmatpush1.msra.mxu0 0.0
  %2343 = vmatprep.subr.mxu0 0.0
  %2344 = vmatpush1.msra.mxu0 0.0
  %2345 = vmatprep.subr.mxu0 0.0
  %2346 = vmatpush1.msra.mxu0 0.0
  %2347 = vmatprep.subr.mxu0 0.0
  %2348 = vmatpush1.msra.mxu0 0.0
  %2349 = vmatprep.subr.mxu0 0.0
  %2350 = vmatpush1.msra.mxu0 0.0
  %2351 = vmatprep.subr.mxu0 0.0
  %2352 = vmatpush1.msra.mxu0 0.0
  %2353 = vmatprep.subr.mxu0 0.0
  %2354 = vmatpush1.msra.mxu0 0.0
  %2355 = vmatprep.subr.mxu0 0.0
  %2356 = vmatpush1.msra.mxu0 0.0
  %2357 = vmatprep.mubr.f32.mxu0 0.0
  %2358 = vmatmul.mubr.f32.gmra.mrb[0].mxu0 %v384
  %v2359 = vpop.f32.mrb[0].mxu0
  %v2360 = vadd.f32 0.0, %v2359
  %v2361 = vpop.f32.mrb[0].mxu0
  %2362 = vdwg.mxu0
  %v2363 = vadd.f32 %v2289, %v2360
  %v2364 = vld [vmem:[%s8 + $0x98] sm:$0x1]
  %v2365 = vlaneseq
  %v2366 = vshrl.u32 %v2365, 7
  %v2367 = vsub.s32 0, %v2366
  %v2368 = vrot.slane %v2364, %v2367
  %v2369 = vadd.f32 %v2363, %v2368
  %v2370 = vmax.f32 %v2369, 0.0
  %v2371 = vld [vmem:[%s9 + $0x40] sm:$0xff]
  %v2372 = vld [vmem:[%s9 + $0x48] sm:$0xff]
  %v2373 = vld [vmem:[%s9 + $0x50] sm:$0xff]
  %v2374 = vld [vmem:[%s9 + $0x58] sm:$0xff]
  %v2375 = vld [vmem:[%s9 + $0x70] sm:$0x1]
  %v2376 = vlaneseq
  %v2377 = vshrl.u32 %v2376, 7
  %v2378 = vsub.s32 0, %v2377
  %v2379 = vrot.slane %v2375, %v2378
  %v2381 = vsel %vm457, %v2370, 0
  %2383 = vmatprep.subr.mxu0 0.0
  %2384 = vmatpush1.msra.mxu0 %v2371
  %2385 = vmatprep.subr.mxu0 0.0
  %2386 = vmatpush1.msra.mxu0 %v2372
  %2387 = vmatprep.subr.mxu0 0.0
  %2388 = vmatpush1.msra.mxu0 %v2373
  %2389 = vmatprep.subr.mxu0 0.0
  %2390 = vmatpush1.msra.mxu0 %v2374
  %2391 = vmatprep.subr.mxu0 0.0
  %2392 = vmatpush1.msra.mxu0 0.0
  %2393 = vmatprep.subr.mxu0 0.0
  %2394 = vmatpush1.msra.mxu0 0.0
  %2395 = vmatprep.subr.mxu0 0.0
  %2396 = vmatpush1.msra.mxu0 0.0
  %2397 = vmatprep.subr.mxu0 0.0
  %2398 = vmatpush1.msra.mxu0 0.0
  %2399 = vmatprep.subr.mxu0 0.0
  %2400 = vmatpush1.msra.mxu0 0.0
  %2401 = vmatprep.subr.mxu0 0.0
  %2402 = vmatpush1.msra.mxu0 0.0
  %2403 = vmatprep.subr.mxu0 0.0
  %2404 = vmatpush1.msra.mxu0 0.0
  %2405 = vmatprep.subr.mxu0 0.0
  %2406 = vmatpush1.msra.mxu0 0.0
  %2407 = vmatprep.subr.mxu0 0.0
  %2408 = vmatpush1.msra.mxu0 0.0
  %2409 = vmatprep.subr.mxu0 0.0
  %2410 = vmatpush1.msra.mxu0 0.0
  %2411 = vmatprep.subr.mxu0 0.0
  %2412 = vmatpush1.msra.mxu0 0.0
  %2413 = vmatprep.subr.mxu0 0.0
  %2414 = vmatpush1.msra.mxu0 0.0
  %2415 = vmatprep.subr.mxu0 0.0
  %2416 = vmatpush1.msra.mxu0 0.0
  %2417 = vmatprep.subr.mxu0 0.0
  %2418 = vmatpush1.msra.mxu0 0.0
  %2419 = vmatprep.subr.mxu0 0.0
  %2420 = vmatpush1.msra.mxu0 0.0
  %2421 = vmatprep.subr.mxu0 0.0
  %2422 = vmatpush1.msra.mxu0 0.0
  %2423 = vmatprep.subr.mxu0 0.0
  %2424 = vmatpush1.msra.mxu0 0.0
  %2425 = vmatprep.subr.mxu0 0.0
  %2426 = vmatpush1.msra.mxu0 0.0
  %2427 = vmatprep.subr.mxu0 0.0
  %2428 = vmatpush1.msra.mxu0 0.0
  %2429 = vmatprep.subr.mxu0 0.0
  %2430 = vmatpush1.msra.mxu0 0.0
  %2431 = vmatprep.subr.mxu0 0.0
  %2432 = vmatpush1.msra.mxu0 0.0
  %2433 = vmatprep.subr.mxu0 0.0
  %2434 = vmatpush1.msra.mxu0 0.0
  %2435 = vmatprep.subr.mxu0 0.0
  %2436 = vmatpush1.msra.mxu0 0.0
  %2437 = vmatprep.subr.mxu0 0.0
  %2438 = vmatpush1.msra.mxu0 0.0
  %2439 = vmatprep.subr.mxu0 0.0
  %2440 = vmatpush1.msra.mxu0 0.0
  %2441 = vmatprep.subr.mxu0 0.0
  %2442 = vmatpush1.msra.mxu0 0.0
  %2443 = vmatprep.subr.mxu0 0.0
  %2444 = vmatpush1.msra.mxu0 0.0
  %2445 = vmatprep.subr.mxu0 0.0
  %2446 = vmatpush1.msra.mxu0 0.0
  %2447 = vmatprep.mubr.f32.mxu0 0.0
  %2448 = vmatmul.mubr.f32.gmra.mrb[0].mxu0 %v2381
  %v2449 = vpop.f32.mrb[0].mxu0
  %v2450 = vadd.f32 %v2379, %v2449
  %v2451 = vpop.f32.mrb[0].mxu0
  %2452 = vdwg.mxu0
  %2453 = vst.msk [vmem:[%s10] sm:$0xff] %vm197, %v1267
  %2454 = vst.msk [vmem:[%s10 + $0x8] sm:$0xff] %vm197, %v1272
  %2455 = vst.msk [vmem:[%s10 + $0x10] sm:$0xff] %vm197, %v1277
  %2456 = vst.msk [vmem:[%s10 + $0x18] sm:$0xff] %vm197, %v1282
  %2457 = vst.msk [vmem:[%s10 + $0x20] sm:$0xff] %vm197, %v1287
  %2458 = vst.msk [vmem:[%s10 + $0x28] sm:$0xff] %vm197, %v1292
  %2459 = vst.msk [vmem:[%s10 + $0x30] sm:$0xff] %vm197, %v1297
  %2460 = vst.msk [vmem:[%s10 + $0x38] sm:$0xff] %vm197, %v1302
  %2461 = vst.msk [vmem:[%s10 + $0x40] sm:$0xff] %vm197, %v1307
  %2462 = vst.msk [vmem:[%s10 + $0x48] sm:$0xff] %vm197, %v1312
  %2463 = vst.msk [vmem:[%s10 + $0x50] sm:$0xff] %vm197, %v1317
  %2464 = vst.msk [vmem:[%s10 + $0x58] sm:$0xff] %vm197, %v1322
  %2465 = vst.msk [vmem:[%s10 + $0x60] sm:$0xff] %vm197, %v1914
  %2466 = vst.msk [vmem:[%s10 + $0x68] sm:$0xff] %vm197, %v1919
  %2467 = vst.msk [vmem:[%s10 + $0x70] sm:$0xff] %vm197, %v1924
  %2468 = vst.msk [vmem:[%s10 + $0x78] sm:$0xff] %vm197, %v1929
  %2469 = vst.msk [vmem:[%s10 + $0x80] sm:$0xff] %vm197, %v2450
  // Predicated region
  $region42: #{rfm_block_forward.1} parent=0 // pred_check
    _
  $region43: #{rfm_block_forward.1} parent=0 // pred_check_branch
    %2471 = sbr.rel (0) target = $region45
  $region44: #{rfm_block_forward.1} parent=0 // pred_region
    _
  $region45: #{rfm_block_forward.1} parent=0 // pred_fallthru
    _
  // Predicated region
  $region46: #{rfm_block_forward.1} parent=0 // pred_check
    _
  $region47: #{rfm_block_forward.1} parent=0 // pred_check_branch
    %2473 = sbr.rel (0) target = $region49
  $region48: #{rfm_block_forward.1} parent=0 // pred_region
    _
  $region49: #{rfm_block_forward.1} parent=0 // pred_fallthru
    _

</llo_original>
